<compile_context>
chip_gen: v7x
topology: tpu7x:2x2x1
jax: 0.10.0
libtpu: 0.0.40
codegen_flags: <defaults>
</compile_context>

<pallas_src>
import functools

import jax
import jax.numpy as jnp
from jax.experimental import pallas as pl
from jax.experimental.pallas import tpu as pltpu

EPS = 1e-5


def _triple_block_kernel(x_ref, w1_ref, w2_ref, w3_ref, gb_ref, avg_ref,
                         out_ref, *, H):
    NH = x_ref.shape[0]

    def shift3(cur):
        # Lane-concat [x[h-1] | x[h] | x[h+1]].  pltpu.roll (sublane rotate on
        # the XLU) + one iota mask handles both the 'same' H padding and the
        # image boundaries inside the flattened N*H axis (rows with h==0 /
        # h==H-1 receive zeros for the out-of-image neighbor).
        h = jax.lax.broadcasted_iota(jnp.int32, cur.shape, 0) % H
        prev = jnp.where(h != 0, pltpu.roll(cur, 1, axis=0), 0.0)
        nxt = jnp.where(h != H - 1, pltpu.roll(cur, NH - 1, axis=0), 0.0)
        return jnp.concatenate([prev, cur, nxt], axis=-1)       # (NH, 3K)

    def conv_bn_relu(cur, w_ref, blk):
        # 3x3 'same' conv == ONE matmul against the dy-stacked banded weights
        # (dx taps and W zero-padding folded into the band wrapper-side).
        y = jnp.dot(shift3(cur), w_ref[...],
                    preferred_element_type=jnp.float32)          # (NH, WC)
        # Single-pass training-mode BN stats; one (2, WC) x (WC, WC) matmul
        # pools per-(w,c) lane sums to per-channel values replicated per lane.
        s1 = jnp.sum(y, axis=0, keepdims=True)                   # (1, WC)
        s2 = jnp.sum(y * y, axis=0, keepdims=True)               # (1, WC)
        stats = jnp.dot(jnp.concatenate([s1, s2], axis=0), avg_ref[...],
                        preferred_element_type=jnp.float32)      # (2, WC)
        mean = stats[0:1, :]
        var = stats[1:2, :] - mean * mean                        # biased var
        inv_std = jax.lax.rsqrt(var + EPS)                       # EUP
        gamma = gb_ref[2 * blk + 0:2 * blk + 1, :]
        beta = gb_ref[2 * blk + 1:2 * blk + 2, :]
        scale = gamma * inv_std
        shift = beta - mean * scale
        return jnp.maximum(y * scale + shift, 0.0)

    a = conv_bn_relu(x_ref[...], w1_ref, 0)
    a = conv_bn_relu(a, w2_ref, 1)
    out_ref[...] = conv_bn_relu(a, w3_ref, 2)     # lane-dense (NH, WC) store


def _band_matrices(w_hwio, W):
    """(3,3,cin,cout) HWIO conv weights -> (3, W*cin, W*cout) banded matrices.

    B[dy, wi*cin+ci, wo*cout+co] = w[dy, wi-wo+1, ci, co] when 0<=wi-wo+1<3,
    else 0 — the dx taps AND the 'same' zero-padding along W are folded into a
    single matmul operand per kernel row.
    """
    kh, kw, cin, cout = w_hwio.shape
    wi = jnp.arange(W)[:, None]
    wo = jnp.arange(W)[None, :]
    dx = wi - wo + 1
    valid = (dx >= 0) & (dx < kw)
    dxc = jnp.clip(dx, 0, kw - 1)
    g = w_hwio[:, dxc, :, :]                                # (kh, W, W, cin, cout)
    g = jnp.where(valid[None, :, :, None, None], g, 0.0)
    return jnp.transpose(g, (0, 1, 3, 2, 4)).reshape(kh, W * cin, W * cout)


def _stacked_band(w_hwio, W, k_pad):
    """dy-stacked (3*k_pad, W*cout) weight; K zero-padded to k_pad per dy."""
    b = _band_matrices(w_hwio.astype(jnp.float32), W)       # (3, K, WC)
    k = b.shape[1]
    if k_pad != k:
        b = jnp.pad(b, ((0, 0), (0, k_pad - k), (0, 0)))
    return b.reshape(3 * k_pad, b.shape[-1])


@jax.jit
def triple_block(x_nchw, params):
    """params: list of 3 tuples (w_hwio, conv_bias, bn_gamma, bn_beta)."""
    N, Cin, H, W = x_nchw.shape
    Cout = params[0][0].shape[-1]
    NH, WC = N * H, W * Cout
    K1 = W * Cin
    K1p = ((K1 + 127) // 128) * 128            # vreg-aligned lane width

    # NCHW -> folded channels-last (N*H, W*Cin), lane-padded to K1p.
    # TODO(synk): the NCHW<->folded relayouts are kept only for the PyTorch
    # output convention; drop them if the consumer accepts the folded layout.
    x_fold = jnp.transpose(x_nchw, (0, 2, 3, 1)).astype(jnp.float32)
    x_fold = x_fold.reshape(NH, K1)
    if K1p != K1:
        x_fold = jnp.pad(x_fold, ((0, 0), (0, K1p - K1)))

    w1 = _stacked_band(params[0][0], W, K1p)                 # (3*K1p, WC)
    w2 = _stacked_band(params[1][0], W, WC)                  # (3*WC, WC)
    w3 = _stacked_band(params[2][0], W, WC)

    # Packed per-block BN affine params, lane-tiled (w-major layout).  The
    # conv bias is intentionally dropped: it cancels under training-mode BN.
    rows = []
    for (_, _, g, be) in params:
        rows.append(jnp.tile(g.astype(jnp.float32), W))
        rows.append(jnp.tile(be.astype(jnp.float32), W))
    gb = jnp.stack(rows)                                     # (6, WC)

    # Lane-dense (WC, WC) channel-averaging matrix (pool + spread + 1/count).
    chan = jnp.arange(WC, dtype=jnp.int32) % Cout
    avg = (chan[:, None] == chan[None, :]).astype(jnp.float32) / float(N * H * W)

    flops = (2 * NH * (3 * K1p) * WC + 2 * 2 * NH * (3 * WC) * WC
             + 3 * 2 * 2 * WC * WC)
    bytes_accessed = 4 * (NH * K1p + w1.size + w2.size + w3.size
                          + gb.size + avg.size + NH * WC)
    cost = pl.CostEstimate(flops=int(flops), transcendentals=int(3 * WC),
                           bytes_accessed=int(bytes_accessed))

    # VMEM budget: operands + live values, clamped below physical VMEM (v7x
    # has only 64 MiB/TC); single grid step -> no double-buffer multiplier.
    resident_bytes = bytes_accessed + 4 * (3 * NH * 3 * WC + NH * K1p)
    try:
        phys_vmem = int(pltpu.get_tpu_info().vmem_capacity_bytes)
    except Exception:
        phys_vmem = 64 * 1024 * 1024
    vmem_limit = int(min(phys_vmem - 8 * 1024 * 1024,
                         max(4 * 1024 * 1024, 3 * resident_bytes)))

    # TODO(synk): for batches that do not fit VMEM (and to use v7x's second
    # TensorCore) switch to a grid-tiled two-pass BN (pass 1: tiled per-channel
    # sum/sumsq; pass 2: tiled normalize) with a 'parallel' grid axis.
    vmem = pl.BlockSpec(memory_space=pltpu.MemorySpace.VMEM)
    out_fold = pl.pallas_call(
        functools.partial(_triple_block_kernel, H=H),
        out_shape=jax.ShapeDtypeStruct((NH, WC), jnp.float32),
        in_specs=[vmem] * 6,
        out_specs=vmem,
        compiler_params=pltpu.CompilerParams(vmem_limit_bytes=vmem_limit),
        cost_estimate=cost,
    )(x_fold, w1, w2, w3, gb, avg)

    # Folded (N*H, W*Cout) -> NCHW to match the PyTorch output convention.
    out_nhwc = out_fold.reshape(N, H, W, Cout)
    return jnp.transpose(out_nhwc, (0, 3, 1, 2))


def reference_triple_block(x_nchw, params):
    """Pure-JAX reference mirroring the PyTorch forward (training-mode BN)."""
    y = jnp.transpose(x_nchw, (0, 2, 3, 1)).astype(jnp.float32)
    for (w, b, g, be) in params:
        y = jax.lax.conv_general_dilated(
            y, w, window_strides=(1, 1), padding="SAME",
            dimension_numbers=("NHWC", "HWIO", "NHWC")) + b.reshape(1, 1, 1, -1)
        mean = jnp.mean(y, axis=(0, 1, 2), keepdims=True)
        var = jnp.mean((y - mean) ** 2, axis=(0, 1, 2), keepdims=True)
        y = (y - mean) / jnp.sqrt(var + EPS) * g.reshape(1, 1, 1, -1) \
            + be.reshape(1, 1, 1, -1)
        y = jnp.maximum(y, 0.0)
    return jnp.transpose(y, (0, 3, 1, 2))


def make_params(key, in_channels, out_channels):
    """Deterministic synthetic parameters (shapes from TripleBlock.__init__)."""
    params = []
    cin = in_channels
    for i in range(3):
        k_w, k_b, key = jax.random.split(key, 3)
        fan_in = cin * 9
        w = jax.random.normal(k_w, (3, 3, cin, out_channels), jnp.float32)
        w = w * (1.0 / jnp.sqrt(fan_in))                       # HWIO
        b = 0.01 * jax.random.normal(k_b, (out_channels,), jnp.float32)
        gamma = jnp.ones((out_channels,), jnp.float32) + 0.05 * i
        beta = jnp.full((out_channels,), 0.02 * (i + 1), jnp.float32)
        params.append((w, b, gamma, beta))
        cin = out_channels
    return params


if __name__ == "__main__":
    key = jax.random.PRNGKey(0)
    k_x, k_p = jax.random.split(key)

    N, Cin, Cout, H, W = 2, 4, 8, 16, 16
    x = jax.random.normal(k_x, (N, Cin, H, W), jnp.float32)     # NCHW input
    params = make_params(k_p, Cin, Cout)

    out = jax.block_until_ready(triple_block(x, params))

    ref = reference_triple_block(x, params)
    assert out.shape == (N, Cout, H, W), out.shape
    max_err = float(jnp.max(jnp.abs(out - ref)))
    assert max_err < 1e-4, max_err

    print("KERNEL_OK")
</pallas_src>

<mosaic_0001>
module attributes {stable_mosaic.version = 11 : i64} {
  func.func @_triple_block_kernel(%arg0: memref<32x128xf32, #tpu.memory_space<vmem>>, %arg1: memref<384x128xf32, #tpu.memory_space<vmem>>, %arg2: memref<384x128xf32, #tpu.memory_space<vmem>>, %arg3: memref<384x128xf32, #tpu.memory_space<vmem>>, %arg4: memref<6x128xf32, #tpu.memory_space<vmem>>, %arg5: memref<128x128xf32, #tpu.memory_space<vmem>>, %arg6: memref<32x128xf32, #tpu.memory_space<vmem>>) attributes {dimension_semantics = [], scalar_prefetch = 0 : i64, scratch_operands = 0 : i64, tpu.core_type = #tpu.core_type<tc>} {
    %c0 = arith.constant 0 : index
    %c0_0 = arith.constant 0 : index
    %0 = vector.load %arg0[%c0, %c0_0] : memref<32x128xf32, #tpu.memory_space<vmem>>, vector<32x128xf32>
    %1 = tpu.iota {dimensions = array<i32: 0>} : vector<32x128xi32>
    %c16_i32 = arith.constant 16 : i32
    %c0_i32 = arith.constant 0 : i32
    %2 = arith.cmpi eq, %c16_i32, %c0_i32 : i32
    %c1_i32 = arith.constant 1 : i32
    %3 = arith.select %2, %c1_i32, %c16_i32 : i32
    %4 = vector.broadcast %3 : i32 to vector<32x128xi32>
    %5 = arith.remsi %1, %4 : vector<32x128xi32>
    %c0_i32_1 = arith.constant 0 : i32
    %6 = vector.broadcast %c0_i32_1 : i32 to vector<32x128xi32>
    %7 = arith.cmpi ne, %5, %6 : vector<32x128xi32>
    %c0_i32_2 = arith.constant 0 : i32
    %8 = vector.broadcast %c0_i32_2 : i32 to vector<32x128xi32>
    %9 = arith.cmpi slt, %5, %8 : vector<32x128xi32>
    %c0_i32_3 = arith.constant 0 : i32
    %10 = arith.cmpi slt, %3, %c0_i32_3 : i32
    %11 = vector.broadcast %10 : i1 to vector<32x128xi1>
    %12 = vector.broadcast %11 : vector<32x128xi1> to vector<32x128xi1>
    %13 = arith.xori %9, %12 : vector<32x128xi1>
    %14 = arith.andi %13, %7 : vector<32x128xi1>
    %15 = vector.broadcast %3 : i32 to vector<32x128xi32>
    %16 = arith.addi %5, %15 : vector<32x128xi32>
    %17 = arith.select %14, %16, %5 : vector<32x128xi1>, vector<32x128xi32>
    %c0_i32_4 = arith.constant 0 : i32
    %18 = vector.broadcast %c0_i32_4 : i32 to vector<32x128xi32>
    %19 = arith.cmpi ne, %17, %18 : vector<32x128xi32>
    %c1_i32_5 = arith.constant 1 : i32
    %20 = tpu.dynamic_rotate %0 by %c1_i32_5 dim 0 : vector<32x128xf32>, i32 -> vector<32x128xf32>
    %cst = arith.constant 0.000000e+00 : f32
    %21 = vector.broadcast %cst : f32 to vector<32x128xf32>
    %22 = arith.select %19, %20, %21 : vector<32x128xi1>, vector<32x128xf32>
    %c15_i32 = arith.constant 15 : i32
    %23 = vector.broadcast %c15_i32 : i32 to vector<32x128xi32>
    %24 = arith.cmpi ne, %17, %23 : vector<32x128xi32>
    %c31_i32 = arith.constant 31 : i32
    %25 = tpu.dynamic_rotate %0 by %c31_i32 dim 0 : vector<32x128xf32>, i32 -> vector<32x128xf32>
    %cst_6 = arith.constant 0.000000e+00 : f32
    %26 = vector.broadcast %cst_6 : f32 to vector<32x128xf32>
    %27 = arith.select %24, %25, %26 : vector<32x128xi1>, vector<32x128xf32>
    %28 = tpu.concatenate %22, %0, %27 in 1 : vector<32x128xf32>, vector<32x128xf32>, vector<32x128xf32> -> vector<32x384xf32>
    %c0_7 = arith.constant 0 : index
    %c0_8 = arith.constant 0 : index
    %29 = vector.load %arg1[%c0_7, %c0_8] : memref<384x128xf32, #tpu.memory_space<vmem>>, vector<384x128xf32>
    %cst_9 = arith.constant dense<0.000000e+00> : vector<32x128xf32>
    %30 = tpu.matmul %28, %29, %cst_9 {dimension_numbers = #tpu.dot_dimension_numbers<[1], [0], [0], [1], [0, 0, 1, 1], [], []>} : vector<32x384xf32>, vector<384x128xf32>, vector<32x128xf32> -> vector<32x128xf32>
    %cst_10 = arith.constant dense<0.000000e+00> : vector<128xf32>
    %31 = vector.multi_reduction <add>, %30, %cst_10 [0] : vector<32x128xf32> to vector<128xf32>
    %32 = vector.shape_cast %31 : vector<128xf32> to vector<1x128xf32>
    %33 = arith.mulf %30, %30 : vector<32x128xf32>
    %cst_11 = arith.constant dense<0.000000e+00> : vector<128xf32>
    %34 = vector.multi_reduction <add>, %33, %cst_11 [0] : vector<32x128xf32> to vector<128xf32>
    %35 = vector.shape_cast %34 : vector<128xf32> to vector<1x128xf32>
    %36 = tpu.concatenate %32, %35 in 0 : vector<1x128xf32>, vector<1x128xf32> -> vector<2x128xf32>
    %c0_12 = arith.constant 0 : index
    %c0_13 = arith.constant 0 : index
    %37 = vector.load %arg5[%c0_12, %c0_13] : memref<128x128xf32, #tpu.memory_space<vmem>>, vector<128x128xf32>
    %cst_14 = arith.constant dense<0.000000e+00> : vector<2x128xf32>
    %38 = tpu.matmul %36, %37, %cst_14 {dimension_numbers = #tpu.dot_dimension_numbers<[1], [0], [0], [1], [0, 0, 1, 1], [], []>} : vector<2x128xf32>, vector<128x128xf32>, vector<2x128xf32> -> vector<2x128xf32>
    %39 = vector.extract_strided_slice %38 {offsets = [0, 0], sizes = [1, 128], strides = [1, 1]} : vector<2x128xf32> to vector<1x128xf32>
    %40 = vector.extract_strided_slice %38 {offsets = [1, 0], sizes = [1, 128], strides = [1, 1]} : vector<2x128xf32> to vector<1x128xf32>
    %41 = arith.mulf %39, %39 : vector<1x128xf32>
    %42 = arith.subf %40, %41 : vector<1x128xf32>
    %cst_15 = arith.constant 9.99999974E-6 : f32
    %43 = vector.broadcast %cst_15 : f32 to vector<1x128xf32>
    %44 = arith.addf %42, %43 : vector<1x128xf32>
    %45 = math.rsqrt %44 : vector<1x128xf32>
    %c0_16 = arith.constant 0 : index
    %c0_17 = arith.constant 0 : index
    %46 = vector.load %arg4[%c0_16, %c0_17] : memref<6x128xf32, #tpu.memory_space<vmem>>, vector<1x128xf32>
    %c1 = arith.constant 1 : index
    %c0_18 = arith.constant 0 : index
    %47 = vector.load %arg4[%c1, %c0_18] : memref<6x128xf32, #tpu.memory_space<vmem>>, vector<1x128xf32>
    %48 = arith.mulf %46, %45 : vector<1x128xf32>
    %49 = arith.mulf %39, %48 : vector<1x128xf32>
    %50 = arith.subf %47, %49 : vector<1x128xf32>
    %51 = vector.broadcast %48 : vector<1x128xf32> to vector<32x128xf32>
    %52 = arith.mulf %30, %51 : vector<32x128xf32>
    %53 = vector.broadcast %50 : vector<1x128xf32> to vector<32x128xf32>
    %54 = arith.addf %52, %53 : vector<32x128xf32>
    %cst_19 = arith.constant 0.000000e+00 : f32
    %55 = vector.broadcast %cst_19 : f32 to vector<32x128xf32>
    %56 = arith.maximumf %54, %55 : vector<32x128xf32>
    %57 = tpu.iota {dimensions = array<i32: 0>} : vector<32x128xi32>
    %c16_i32_20 = arith.constant 16 : i32
    %c0_i32_21 = arith.constant 0 : i32
    %58 = arith.cmpi eq, %c16_i32_20, %c0_i32_21 : i32
    %c1_i32_22 = arith.constant 1 : i32
    %59 = arith.select %58, %c1_i32_22, %c16_i32_20 : i32
    %60 = vector.broadcast %59 : i32 to vector<32x128xi32>
    %61 = arith.remsi %57, %60 : vector<32x128xi32>
    %c0_i32_23 = arith.constant 0 : i32
    %62 = vector.broadcast %c0_i32_23 : i32 to vector<32x128xi32>
    %63 = arith.cmpi ne, %61, %62 : vector<32x128xi32>
    %c0_i32_24 = arith.constant 0 : i32
    %64 = vector.broadcast %c0_i32_24 : i32 to vector<32x128xi32>
    %65 = arith.cmpi slt, %61, %64 : vector<32x128xi32>
    %c0_i32_25 = arith.constant 0 : i32
    %66 = arith.cmpi slt, %59, %c0_i32_25 : i32
    %67 = vector.broadcast %66 : i1 to vector<32x128xi1>
    %68 = vector.broadcast %67 : vector<32x128xi1> to vector<32x128xi1>
    %69 = arith.xori %65, %68 : vector<32x128xi1>
    %70 = arith.andi %69, %63 : vector<32x128xi1>
    %71 = vector.broadcast %59 : i32 to vector<32x128xi32>
    %72 = arith.addi %61, %71 : vector<32x128xi32>
    %73 = arith.select %70, %72, %61 : vector<32x128xi1>, vector<32x128xi32>
    %c0_i32_26 = arith.constant 0 : i32
    %74 = vector.broadcast %c0_i32_26 : i32 to vector<32x128xi32>
    %75 = arith.cmpi ne, %73, %74 : vector<32x128xi32>
    %c1_i32_27 = arith.constant 1 : i32
    %76 = tpu.dynamic_rotate %56 by %c1_i32_27 dim 0 : vector<32x128xf32>, i32 -> vector<32x128xf32>
    %cst_28 = arith.constant 0.000000e+00 : f32
    %77 = vector.broadcast %cst_28 : f32 to vector<32x128xf32>
    %78 = arith.select %75, %76, %77 : vector<32x128xi1>, vector<32x128xf32>
    %c15_i32_29 = arith.constant 15 : i32
    %79 = vector.broadcast %c15_i32_29 : i32 to vector<32x128xi32>
    %80 = arith.cmpi ne, %73, %79 : vector<32x128xi32>
    %c31_i32_30 = arith.constant 31 : i32
    %81 = tpu.dynamic_rotate %56 by %c31_i32_30 dim 0 : vector<32x128xf32>, i32 -> vector<32x128xf32>
    %cst_31 = arith.constant 0.000000e+00 : f32
    %82 = vector.broadcast %cst_31 : f32 to vector<32x128xf32>
    %83 = arith.select %80, %81, %82 : vector<32x128xi1>, vector<32x128xf32>
    %84 = tpu.concatenate %78, %56, %83 in 1 : vector<32x128xf32>, vector<32x128xf32>, vector<32x128xf32> -> vector<32x384xf32>
    %c0_32 = arith.constant 0 : index
    %c0_33 = arith.constant 0 : index
    %85 = vector.load %arg2[%c0_32, %c0_33] : memref<384x128xf32, #tpu.memory_space<vmem>>, vector<384x128xf32>
    %cst_34 = arith.constant dense<0.000000e+00> : vector<32x128xf32>
    %86 = tpu.matmul %84, %85, %cst_34 {dimension_numbers = #tpu.dot_dimension_numbers<[1], [0], [0], [1], [0, 0, 1, 1], [], []>} : vector<32x384xf32>, vector<384x128xf32>, vector<32x128xf32> -> vector<32x128xf32>
    %cst_35 = arith.constant dense<0.000000e+00> : vector<128xf32>
    %87 = vector.multi_reduction <add>, %86, %cst_35 [0] : vector<32x128xf32> to vector<128xf32>
    %88 = vector.shape_cast %87 : vector<128xf32> to vector<1x128xf32>
    %89 = arith.mulf %86, %86 : vector<32x128xf32>
    %cst_36 = arith.constant dense<0.000000e+00> : vector<128xf32>
    %90 = vector.multi_reduction <add>, %89, %cst_36 [0] : vector<32x128xf32> to vector<128xf32>
    %91 = vector.shape_cast %90 : vector<128xf32> to vector<1x128xf32>
    %92 = tpu.concatenate %88, %91 in 0 : vector<1x128xf32>, vector<1x128xf32> -> vector<2x128xf32>
    %c0_37 = arith.constant 0 : index
    %c0_38 = arith.constant 0 : index
    %93 = vector.load %arg5[%c0_37, %c0_38] : memref<128x128xf32, #tpu.memory_space<vmem>>, vector<128x128xf32>
    %cst_39 = arith.constant dense<0.000000e+00> : vector<2x128xf32>
    %94 = tpu.matmul %92, %93, %cst_39 {dimension_numbers = #tpu.dot_dimension_numbers<[1], [0], [0], [1], [0, 0, 1, 1], [], []>} : vector<2x128xf32>, vector<128x128xf32>, vector<2x128xf32> -> vector<2x128xf32>
    %95 = vector.extract_strided_slice %94 {offsets = [0, 0], sizes = [1, 128], strides = [1, 1]} : vector<2x128xf32> to vector<1x128xf32>
    %96 = vector.extract_strided_slice %94 {offsets = [1, 0], sizes = [1, 128], strides = [1, 1]} : vector<2x128xf32> to vector<1x128xf32>
    %97 = arith.mulf %95, %95 : vector<1x128xf32>
    %98 = arith.subf %96, %97 : vector<1x128xf32>
    %cst_40 = arith.constant 9.99999974E-6 : f32
    %99 = vector.broadcast %cst_40 : f32 to vector<1x128xf32>
    %100 = arith.addf %98, %99 : vector<1x128xf32>
    %101 = math.rsqrt %100 : vector<1x128xf32>
    %c2 = arith.constant 2 : index
    %c0_41 = arith.constant 0 : index
    %102 = vector.load %arg4[%c2, %c0_41] : memref<6x128xf32, #tpu.memory_space<vmem>>, vector<1x128xf32>
    %c3 = arith.constant 3 : index
    %c0_42 = arith.constant 0 : index
    %103 = vector.load %arg4[%c3, %c0_42] : memref<6x128xf32, #tpu.memory_space<vmem>>, vector<1x128xf32>
    %104 = arith.mulf %102, %101 : vector<1x128xf32>
    %105 = arith.mulf %95, %104 : vector<1x128xf32>
    %106 = arith.subf %103, %105 : vector<1x128xf32>
    %107 = vector.broadcast %104 : vector<1x128xf32> to vector<32x128xf32>
    %108 = arith.mulf %86, %107 : vector<32x128xf32>
    %109 = vector.broadcast %106 : vector<1x128xf32> to vector<32x128xf32>
    %110 = arith.addf %108, %109 : vector<32x128xf32>
    %cst_43 = arith.constant 0.000000e+00 : f32
    %111 = vector.broadcast %cst_43 : f32 to vector<32x128xf32>
    %112 = arith.maximumf %110, %111 : vector<32x128xf32>
    %113 = tpu.iota {dimensions = array<i32: 0>} : vector<32x128xi32>
    %c16_i32_44 = arith.constant 16 : i32
    %c0_i32_45 = arith.constant 0 : i32
    %114 = arith.cmpi eq, %c16_i32_44, %c0_i32_45 : i32
    %c1_i32_46 = arith.constant 1 : i32
    %115 = arith.select %114, %c1_i32_46, %c16_i32_44 : i32
    %116 = vector.broadcast %115 : i32 to vector<32x128xi32>
    %117 = arith.remsi %113, %116 : vector<32x128xi32>
    %c0_i32_47 = arith.constant 0 : i32
    %118 = vector.broadcast %c0_i32_47 : i32 to vector<32x128xi32>
    %119 = arith.cmpi ne, %117, %118 : vector<32x128xi32>
    %c0_i32_48 = arith.constant 0 : i32
    %120 = vector.broadcast %c0_i32_48 : i32 to vector<32x128xi32>
    %121 = arith.cmpi slt, %117, %120 : vector<32x128xi32>
    %c0_i32_49 = arith.constant 0 : i32
    %122 = arith.cmpi slt, %115, %c0_i32_49 : i32
    %123 = vector.broadcast %122 : i1 to vector<32x128xi1>
    %124 = vector.broadcast %123 : vector<32x128xi1> to vector<32x128xi1>
    %125 = arith.xori %121, %124 : vector<32x128xi1>
    %126 = arith.andi %125, %119 : vector<32x128xi1>
    %127 = vector.broadcast %115 : i32 to vector<32x128xi32>
    %128 = arith.addi %117, %127 : vector<32x128xi32>
    %129 = arith.select %126, %128, %117 : vector<32x128xi1>, vector<32x128xi32>
    %c0_i32_50 = arith.constant 0 : i32
    %130 = vector.broadcast %c0_i32_50 : i32 to vector<32x128xi32>
    %131 = arith.cmpi ne, %129, %130 : vector<32x128xi32>
    %c1_i32_51 = arith.constant 1 : i32
    %132 = tpu.dynamic_rotate %112 by %c1_i32_51 dim 0 : vector<32x128xf32>, i32 -> vector<32x128xf32>
    %cst_52 = arith.constant 0.000000e+00 : f32
    %133 = vector.broadcast %cst_52 : f32 to vector<32x128xf32>
    %134 = arith.select %131, %132, %133 : vector<32x128xi1>, vector<32x128xf32>
    %c15_i32_53 = arith.constant 15 : i32
    %135 = vector.broadcast %c15_i32_53 : i32 to vector<32x128xi32>
    %136 = arith.cmpi ne, %129, %135 : vector<32x128xi32>
    %c31_i32_54 = arith.constant 31 : i32
    %137 = tpu.dynamic_rotate %112 by %c31_i32_54 dim 0 : vector<32x128xf32>, i32 -> vector<32x128xf32>
    %cst_55 = arith.constant 0.000000e+00 : f32
    %138 = vector.broadcast %cst_55 : f32 to vector<32x128xf32>
    %139 = arith.select %136, %137, %138 : vector<32x128xi1>, vector<32x128xf32>
    %140 = tpu.concatenate %134, %112, %139 in 1 : vector<32x128xf32>, vector<32x128xf32>, vector<32x128xf32> -> vector<32x384xf32>
    %c0_56 = arith.constant 0 : index
    %c0_57 = arith.constant 0 : index
    %141 = vector.load %arg3[%c0_56, %c0_57] : memref<384x128xf32, #tpu.memory_space<vmem>>, vector<384x128xf32>
    %cst_58 = arith.constant dense<0.000000e+00> : vector<32x128xf32>
    %142 = tpu.matmul %140, %141, %cst_58 {dimension_numbers = #tpu.dot_dimension_numbers<[1], [0], [0], [1], [0, 0, 1, 1], [], []>} : vector<32x384xf32>, vector<384x128xf32>, vector<32x128xf32> -> vector<32x128xf32>
    %cst_59 = arith.constant dense<0.000000e+00> : vector<128xf32>
    %143 = vector.multi_reduction <add>, %142, %cst_59 [0] : vector<32x128xf32> to vector<128xf32>
    %144 = vector.shape_cast %143 : vector<128xf32> to vector<1x128xf32>
    %145 = arith.mulf %142, %142 : vector<32x128xf32>
    %cst_60 = arith.constant dense<0.000000e+00> : vector<128xf32>
    %146 = vector.multi_reduction <add>, %145, %cst_60 [0] : vector<32x128xf32> to vector<128xf32>
    %147 = vector.shape_cast %146 : vector<128xf32> to vector<1x128xf32>
    %148 = tpu.concatenate %144, %147 in 0 : vector<1x128xf32>, vector<1x128xf32> -> vector<2x128xf32>
    %c0_61 = arith.constant 0 : index
    %c0_62 = arith.constant 0 : index
    %149 = vector.load %arg5[%c0_61, %c0_62] : memref<128x128xf32, #tpu.memory_space<vmem>>, vector<128x128xf32>
    %cst_63 = arith.constant dense<0.000000e+00> : vector<2x128xf32>
    %150 = tpu.matmul %148, %149, %cst_63 {dimension_numbers = #tpu.dot_dimension_numbers<[1], [0], [0], [1], [0, 0, 1, 1], [], []>} : vector<2x128xf32>, vector<128x128xf32>, vector<2x128xf32> -> vector<2x128xf32>
    %151 = vector.extract_strided_slice %150 {offsets = [0, 0], sizes = [1, 128], strides = [1, 1]} : vector<2x128xf32> to vector<1x128xf32>
    %152 = vector.extract_strided_slice %150 {offsets = [1, 0], sizes = [1, 128], strides = [1, 1]} : vector<2x128xf32> to vector<1x128xf32>
    %153 = arith.mulf %151, %151 : vector<1x128xf32>
    %154 = arith.subf %152, %153 : vector<1x128xf32>
    %cst_64 = arith.constant 9.99999974E-6 : f32
    %155 = vector.broadcast %cst_64 : f32 to vector<1x128xf32>
    %156 = arith.addf %154, %155 : vector<1x128xf32>
    %157 = math.rsqrt %156 : vector<1x128xf32>
    %c4 = arith.constant 4 : index
    %c0_65 = arith.constant 0 : index
    %158 = vector.load %arg4[%c4, %c0_65] : memref<6x128xf32, #tpu.memory_space<vmem>>, vector<1x128xf32>
    %c5 = arith.constant 5 : index
    %c0_66 = arith.constant 0 : index
    %159 = vector.load %arg4[%c5, %c0_66] : memref<6x128xf32, #tpu.memory_space<vmem>>, vector<1x128xf32>
    %160 = arith.mulf %158, %157 : vector<1x128xf32>
    %161 = arith.mulf %151, %160 : vector<1x128xf32>
    %162 = arith.subf %159, %161 : vector<1x128xf32>
    %163 = vector.broadcast %160 : vector<1x128xf32> to vector<32x128xf32>
    %164 = arith.mulf %142, %163 : vector<32x128xf32>
    %165 = vector.broadcast %162 : vector<1x128xf32> to vector<32x128xf32>
    %166 = arith.addf %164, %165 : vector<32x128xf32>
    %cst_67 = arith.constant 0.000000e+00 : f32
    %167 = vector.broadcast %cst_67 : f32 to vector<32x128xf32>
    %168 = arith.maximumf %166, %167 : vector<32x128xf32>
    %c0_68 = arith.constant 0 : index
    %c0_69 = arith.constant 0 : index
    %169 = vector.load %arg6[%c0_68, %c0_69] : memref<32x128xf32, #tpu.memory_space<vmem>>, vector<32x128xf32>
    tpu.vector_store %arg6[%c0_68, %c0_69], %168 {strides = array<i32>} : memref<32x128xf32, #tpu.memory_space<vmem>>, vector<32x128xf32>,
    return
  }
}

</mosaic_0001>

<llo_original>
// kernel: tile.33
$region0: #{tile.33}
  #allocation0 [shape = 's32[1]{0}', space=sflag, size = 0x4, scoped, tag = 'scoped memory for tile.33']
  %s0 = inlined_call_operand.vmem [shape: f32[8], index: 0, kind: input, shape index: {}]
  %s1 = inlined_call_operand.vmem [shape: f32[16,8], index: 1, kind: output, shape index: {}]
  // Predicated region
  $region2: #{tile.33} parent=0 // pred_check
    _
  $region3: #{tile.33} parent=0 // pred_check_branch
    %3 = sbr.rel (0) target = $region5
  $region4: #{tile.33} parent=0 // pred_region
    _
  $region5: #{tile.33} parent=0 // pred_fallthru
    _
  %v4 = vld [vmem:[%s0] ss:$0 sm:$0xff]
  %5 = vst [vmem:[%s1] sm:$0xff] %v4
  %s6 = scalar_lea.vmem %s1, 8
  %7 = vst [vmem:[%s6] sm:$0xff] %v4

// kernel: tile.54
$region0: #{tile.54}
  %s0 = inlined_call_operand.vmem [shape: f32[16,8], index: 0, kind: input, shape index: {}]
  %s1 = inlined_call_operand.vmem [shape: f32[1,128], index: 1, kind: output, shape index: {}]
  $region1: #{tile.54} parent=0
    #allocation0 [shape = 'u8[4096]{0}', space=vmem, size = 0x1000, scoped, tag = 'scoped mem for output reshape']
    %v2 = vld [vmem:[%s0] sm:$0x1]
    %vm3 = vcmask 64512
    %4 = vst.msk [vmem:[#allocation0] sm:$0x1] %vm3, %v2
    %s5 = scalar_lea.vmem %s0, 15
    %v6 = vld [vmem:[%s5] sm:$0x1]
    %7 = vrot.lane.b32.xlu0 %v6, 120
    %v8 = vpop.permute.xlu0 %7
    %vm9 = vcmask 1048512
    %10 = vst.msk [vmem:[#allocation0] sm:$0x1] %vm9, %v8
    %s11 = scalar_lea.vmem %s0, 14
    %v12 = vld [vmem:[%s11] sm:$0x1]
    %13 = vrot.lane.b32.xlu0 %v12, 112
    %v14 = vpop.permute.xlu0 %13
    %vm15 = vcmask 982912
    %16 = vst.msk [vmem:[#allocation0] sm:$0x1] %vm15, %v14
    %s17 = scalar_lea.vmem %s0, 13
    %v18 = vld [vmem:[%s17] sm:$0x1]
    %19 = vrot.lane.b32.xlu0 %v18, 104
    %v20 = vpop.permute.xlu0 %19
    %vm21 = vcmask 917312
    %22 = vst.msk [vmem:[#allocation0] sm:$0x1] %vm21, %v20
    %s23 = scalar_lea.vmem %s0, 12
    %v24 = vld [vmem:[%s23] sm:$0x1]
    %25 = vrot.lane.b32.xlu0 %v24, 96
    %v26 = vpop.permute.xlu0 %25
    %vm27 = vcmask 851712
    %28 = vst.msk [vmem:[#allocation0] sm:$0x1] %vm27, %v26
    %s29 = scalar_lea.vmem %s0, 11
    %v30 = vld [vmem:[%s29] sm:$0x1]
    %31 = vrot.lane.b32.xlu0 %v30, 88
    %v32 = vpop.permute.xlu0 %31
    %vm33 = vcmask 786112
    %34 = vst.msk [vmem:[#allocation0] sm:$0x1] %vm33, %v32
    %s35 = scalar_lea.vmem %s0, 10
    %v36 = vld [vmem:[%s35] sm:$0x1]
    %37 = vrot.lane.b32.xlu0 %v36, 80
    %v38 = vpop.permute.xlu0 %37
    %vm39 = vcmask 720512
    %40 = vst.msk [vmem:[#allocation0] sm:$0x1] %vm39, %v38
    %s41 = scalar_lea.vmem %s0, 9
    %v42 = vld [vmem:[%s41] sm:$0x1]
    %43 = vrot.lane.b32.xlu0 %v42, 72
    %v44 = vpop.permute.xlu0 %43
    %vm45 = vcmask 654912
    %46 = vst.msk [vmem:[#allocation0] sm:$0x1] %vm45, %v44
    %s47 = scalar_lea.vmem %s0, 8
    %v48 = vld [vmem:[%s47] sm:$0x1]
    %49 = vrot.lane.b32.xlu0 %v48, 64
    %v50 = vpop.permute.xlu0 %49
    %vm51 = vcmask 589312
    %52 = vst.msk [vmem:[#allocation0] sm:$0x1] %vm51, %v50
    %s53 = scalar_lea.vmem %s0, 7
    %v54 = vld [vmem:[%s53] sm:$0x1]
    %55 = vrot.lane.b32.xlu0 %v54, 56
    %v56 = vpop.permute.xlu0 %55
    %vm57 = vcmask 523712
    %58 = vst.msk [vmem:[#allocation0] sm:$0x1] %vm57, %v56
    %s59 = scalar_lea.vmem %s0, 6
    %v60 = vld [vmem:[%s59] sm:$0x1]
    %61 = vrot.lane.b32.xlu0 %v60, 48
    %v62 = vpop.permute.xlu0 %61
    %vm63 = vcmask 458112
    %64 = vst.msk [vmem:[#allocation0] sm:$0x1] %vm63, %v62
    %s65 = scalar_lea.vmem %s0, 5
    %v66 = vld [vmem:[%s65] sm:$0x1]
    %67 = vrot.lane.b32.xlu0 %v66, 40
    %v68 = vpop.permute.xlu0 %67
    %vm69 = vcmask 392512
    %70 = vst.msk [vmem:[#allocation0] sm:$0x1] %vm69, %v68
    %s71 = scalar_lea.vmem %s0, 4
    %v72 = vld [vmem:[%s71] sm:$0x1]
    %73 = vrot.lane.b32.xlu0 %v72, 32
    %v74 = vpop.permute.xlu0 %73
    %vm75 = vcmask 326912
    %76 = vst.msk [vmem:[#allocation0] sm:$0x1] %vm75, %v74
    %s77 = scalar_lea.vmem %s0, 3
    %v78 = vld [vmem:[%s77] sm:$0x1]
    %79 = vrot.lane.b32.xlu0 %v78, 24
    %v80 = vpop.permute.xlu0 %79
    %vm81 = vcmask 261312
    %82 = vst.msk [vmem:[#allocation0] sm:$0x1] %vm81, %v80
    %s83 = scalar_lea.vmem %s0, 2
    %v84 = vld [vmem:[%s83] sm:$0x1]
    %85 = vrot.lane.b32.xlu0 %v84, 16
    %v86 = vpop.permute.xlu0 %85
    %vm87 = vcmask 195712
    %88 = vst.msk [vmem:[#allocation0] sm:$0x1] %vm87, %v86
    %s89 = scalar_lea.vmem %s0, 1
    %v90 = vld [vmem:[%s89] sm:$0x1]
    %91 = vrot.lane.b32.xlu0 %v90, 8
    %v92 = vpop.permute.xlu0 %91
    %vm93 = vcmask 130112
    %94 = vst.msk [vmem:[#allocation0] sm:$0x1] %vm93, %v92
    %s96 = sshllo.u32 0, 1
    %v98 = vld [vmem:[#allocation0] sm:%s96]
    %s99 = sshllo.u32 0, 1
    %100 = vst [vmem:[%s1] sm:%s99] %v98

// kernel: triple_block.1
$region0: #{triple_block.1}
  #allocation0 [shape = 'u32[]', space=smem, size = 0x4, offset = 0x4, fixed_abs, tag = 'smem constant byte address 0x4 - core index']
  #allocation1 [shape = 'u32[144,128]{1,0:T(1,128)}', space=vmem, size = 0x12000, scoped, tag = 'internal scratch']
  %s0 = inlined_call_operand.vmem [shape: f32[32,128], index: 0, kind: input, shape index: {}]
  %s1 = inlined_call_operand.vmem [shape: f32[384,128], index: 1, kind: input, shape index: {}]
  %s2 = inlined_call_operand.vmem [shape: f32[384,128], index: 2, kind: input, shape index: {}]
  %s3 = inlined_call_operand.vmem [shape: f32[384,128], index: 3, kind: input, shape index: {}]
  %s4 = inlined_call_operand.vmem [shape: f32[6,128], index: 4, kind: input, shape index: {}]
  %s5 = inlined_call_operand.vmem [shape: f32[128,128], index: 5, kind: input, shape index: {}]
  %s6 = inlined_call_operand.vmem [shape: f32[32,128], index: 6, kind: output, shape index: {}]
  %s7 = sld [smem:[#allocation0]]
  $region34: #{triple_block.1} parent=0
    _
  %s9 = ssub.s32 1, %s7
  %s10 = scalar_select 0, %s9, %s7
  // Predicated region
  $region2: #{triple_block.1} parent=0 // pred_check
    _
  $region3: #{triple_block.1} parent=0 // pred_check_branch
    %12 = sbr.rel (0) target = $region5
  $region4: #{triple_block.1} parent=0 // pred_region
    _
  $region5: #{triple_block.1} parent=0 // pred_fallthru
    _
  // Predicated region
  $region6: #{triple_block.1} parent=0 // pred_check
    _
  $region7: #{triple_block.1} parent=0 // pred_check_branch
    %14 = sbr.rel (0) target = $region9
  $region8: #{triple_block.1} parent=0 // pred_region
    _
  $region9: #{triple_block.1} parent=0 // pred_fallthru
    _
  // Predicated region
  $region10: #{triple_block.1} parent=0 // pred_check
    _
  $region11: #{triple_block.1} parent=0 // pred_check_branch
    %16 = sbr.rel (0) target = $region13
  $region12: #{triple_block.1} parent=0 // pred_region
    _
  $region13: #{triple_block.1} parent=0 // pred_fallthru
    _
  // Predicated region
  $region14: #{triple_block.1} parent=0 // pred_check
    _
  $region15: #{triple_block.1} parent=0 // pred_check_branch
    %18 = sbr.rel (0) target = $region17
  $region16: #{triple_block.1} parent=0 // pred_region
    _
  $region17: #{triple_block.1} parent=0 // pred_fallthru
    _
  // Predicated region
  $region18: #{triple_block.1} parent=0 // pred_check
    _
  $region19: #{triple_block.1} parent=0 // pred_check_branch
    %20 = sbr.rel (0) target = $region21
  $region20: #{triple_block.1} parent=0 // pred_region
    _
  $region21: #{triple_block.1} parent=0 // pred_fallthru
    _
  // Predicated region
  $region22: #{triple_block.1} parent=0 // pred_check
    _
  $region23: #{triple_block.1} parent=0 // pred_check_branch
    %22 = sbr.rel (0) target = $region25
  $region24: #{triple_block.1} parent=0 // pred_region
    _
  $region25: #{triple_block.1} parent=0 // pred_fallthru
    _
  %v23 = vld [vmem:[%s0] sm:$0xff]
  %v24 = vld [vmem:[%s0 + $0x8] sm:$0xff]
  %v25 = vld [vmem:[%s0 + $0x10] sm:$0xff]
  %v26 = vld [vmem:[%s0 + $0x18] sm:$0xff]
  %v27 = vlaneseq
  %v28 = vshrl.u32 %v27, 7
  %v29 = vadd.s32 %v28, 8
  %v30 = vadd.s32 %v28, 16
  %v31 = vadd.s32 %v28, 24
  %vm32 = vcmp.lt.s32.totalorder %v28, 0
  %v33 = vsub.s32 0, %v28
  %v34 = vsel %vm32, %v33, %v28
  %v35 = vshrl.u32 %v34, 4
  %v36 = vand.u32 %v34, 15
  %v37 = vsub.s32 0, %v36
  %v38 = vsel %vm32, %v37, %v36
  %vm39 = vcmp.lt.s32.totalorder %v29, 0
  %v40 = vsub.s32 0, %v29
  %v41 = vsel %vm39, %v40, %v29
  %v42 = vshrl.u32 %v41, 4
  %v43 = vand.u32 %v41, 15
  %v44 = vsub.s32 0, %v43
  %v45 = vsel %vm39, %v44, %v43
  %vm46 = vcmp.lt.s32.totalorder %v30, 0
  %v47 = vsub.s32 0, %v30
  %v48 = vsel %vm46, %v47, %v30
  %v49 = vshrl.u32 %v48, 4
  %v50 = vand.u32 %v48, 15
  %v51 = vsub.s32 0, %v50
  %v52 = vsel %vm46, %v51, %v50
  %vm53 = vcmp.lt.s32.totalorder %v31, 0
  %v54 = vsub.s32 0, %v31
  %v55 = vsel %vm53, %v54, %v31
  %v56 = vshrl.u32 %v55, 4
  %v57 = vand.u32 %v55, 15
  %v58 = vsub.s32 0, %v57
  %v59 = vsel %vm53, %v58, %v57
  %vm60 = vcmp.ne.s32.totalorder %v38, 0
  %vm61 = vcmp.ne.s32.totalorder %v45, 0
  %vm62 = vcmp.ne.s32.totalorder %v52, 0
  %vm63 = vcmp.ne.s32.totalorder %v59, 0
  %vm64 = vcmp.lt.s32.totalorder %v38, 0
  %vm65 = vcmp.lt.s32.totalorder %v45, 0
  %vm66 = vcmp.lt.s32.totalorder %v52, 0
  %vm67 = vcmp.lt.s32.totalorder %v59, 0
  %vm68 = vmand %vm64, %vm60
  %vm69 = vmand %vm65, %vm61
  %vm70 = vmand %vm66, %vm62
  %vm71 = vmand %vm67, %vm63
  %v72 = vadd.s32 %v38, 16
  %v73 = vadd.s32 %v45, 16
  %v74 = vadd.s32 %v52, 16
  %v75 = vadd.s32 %v59, 16
  %v76 = vsel %vm68, %v72, %v38
  %v77 = vsel %vm69, %v73, %v45
  %v78 = vsel %vm70, %v74, %v52
  %v79 = vsel %vm71, %v75, %v59
  %vm80 = vcmp.ne.s32.totalorder %v76, 0
  %vm81 = vcmp.ne.s32.totalorder %v77, 0
  %vm82 = vcmp.ne.s32.totalorder %v78, 0
  %vm83 = vcmp.ne.s32.totalorder %v79, 0
  %v84 = vrot.slane %v23, 7
  %v85 = vrot.slane %v24, 7
  %v86 = vrot.slane %v25, 7
  %v87 = vrot.slane %v26, 7
  %vm88 = vcmp.lt.s32.totalorder %v28, 1
  %v89 = vsel %vm88, %v86, %v87
  %v90 = vsel %vm88, %v85, %v86
  %v91 = vsel %vm88, %v84, %v85
  %v92 = vsel %vm88, %v87, %v84
  %v93 = vsel %vm80, %v92, 0.0
  %v94 = vsel %vm81, %v91, 0.0
  %v95 = vsel %vm82, %v90, 0.0
  %v96 = vsel %vm83, %v89, 0.0
  %vm97 = vcmp.ne.s32.totalorder %v76, 15
  %vm98 = vcmp.ne.s32.totalorder %v77, 15
  %vm99 = vcmp.ne.s32.totalorder %v78, 15
  %vm100 = vcmp.ne.s32.totalorder %v79, 15
  %v101 = vrot.slane %v23, 1
  %v102 = vrot.slane %v24, 1
  %v103 = vrot.slane %v25, 1
  %v104 = vrot.slane %v26, 1
  %vm105 = vcmp.lt.s32.totalorder %v28, 7
  %v106 = vsel %vm105, %v103, %v104
  %v107 = vsel %vm105, %v102, %v103
  %v108 = vsel %vm105, %v101, %v102
  %v109 = vsel %vm105, %v104, %v101
  %v110 = vsel %vm97, %v108, 0.0
  %v111 = vsel %vm98, %v107, 0.0
  %v112 = vsel %vm99, %v106, 0.0
  %v113 = vsel %vm100, %v109, 0.0
  %v114 = vld [vmem:[%s1] sm:$0xff]
  %v115 = vld [vmem:[%s1 + $0x8] sm:$0xff]
  %v116 = vld [vmem:[%s1 + $0x10] sm:$0xff]
  %v117 = vld [vmem:[%s1 + $0x18] sm:$0xff]
  %v118 = vld [vmem:[%s1 + $0x20] sm:$0xff]
  %v119 = vld [vmem:[%s1 + $0x28] sm:$0xff]
  %v120 = vld [vmem:[%s1 + $0x30] sm:$0xff]
  %v121 = vld [vmem:[%s1 + $0x38] sm:$0xff]
  %v122 = vld [vmem:[%s1 + $0x40] sm:$0xff]
  %v123 = vld [vmem:[%s1 + $0x48] sm:$0xff]
  %v124 = vld [vmem:[%s1 + $0x50] sm:$0xff]
  %v125 = vld [vmem:[%s1 + $0x58] sm:$0xff]
  %v126 = vld [vmem:[%s1 + $0x60] sm:$0xff]
  %v127 = vld [vmem:[%s1 + $0x68] sm:$0xff]
  %v128 = vld [vmem:[%s1 + $0x70] sm:$0xff]
  %v129 = vld [vmem:[%s1 + $0x78] sm:$0xff]
  %v130 = vld [vmem:[%s1 + $0x80] sm:$0xff]
  %v131 = vld [vmem:[%s1 + $0x88] sm:$0xff]
  %v132 = vld [vmem:[%s1 + $0x90] sm:$0xff]
  %v133 = vld [vmem:[%s1 + $0x98] sm:$0xff]
  %v134 = vld [vmem:[%s1 + $0xa0] sm:$0xff]
  %v135 = vld [vmem:[%s1 + $0xa8] sm:$0xff]
  %v136 = vld [vmem:[%s1 + $0xb0] sm:$0xff]
  %v137 = vld [vmem:[%s1 + $0xb8] sm:$0xff]
  %v138 = vld [vmem:[%s1 + $0xc0] sm:$0xff]
  %v139 = vld [vmem:[%s1 + $0xc8] sm:$0xff]
  %v140 = vld [vmem:[%s1 + $0xd0] sm:$0xff]
  %v141 = vld [vmem:[%s1 + $0xd8] sm:$0xff]
  %v142 = vld [vmem:[%s1 + $0xe0] sm:$0xff]
  %v143 = vld [vmem:[%s1 + $0xe8] sm:$0xff]
  %v144 = vld [vmem:[%s1 + $0xf0] sm:$0xff]
  %v145 = vld [vmem:[%s1 + $0xf8] sm:$0xff]
  %v146 = vld [vmem:[%s1 + $0x100] sm:$0xff]
  %v147 = vld [vmem:[%s1 + $0x108] sm:$0xff]
  %v148 = vld [vmem:[%s1 + $0x110] sm:$0xff]
  %v149 = vld [vmem:[%s1 + $0x118] sm:$0xff]
  %v150 = vld [vmem:[%s1 + $0x120] sm:$0xff]
  %v151 = vld [vmem:[%s1 + $0x128] sm:$0xff]
  %v152 = vld [vmem:[%s1 + $0x130] sm:$0xff]
  %v153 = vld [vmem:[%s1 + $0x138] sm:$0xff]
  %v154 = vld [vmem:[%s1 + $0x140] sm:$0xff]
  %v155 = vld [vmem:[%s1 + $0x148] sm:$0xff]
  %v156 = vld [vmem:[%s1 + $0x150] sm:$0xff]
  %v157 = vld [vmem:[%s1 + $0x158] sm:$0xff]
  %v158 = vld [vmem:[%s1 + $0x160] sm:$0xff]
  %v159 = vld [vmem:[%s1 + $0x168] sm:$0xff]
  %v160 = vld [vmem:[%s1 + $0x170] sm:$0xff]
  %v161 = vld [vmem:[%s1 + $0x178] sm:$0xff]
  %162 = vmatprep.subr.mxu0 0.0
  %163 = vmatpush1.msra.mxu0 %v114
  %164 = vmatprep.subr.mxu0 0.0
  %165 = vmatpush1.msra.mxu0 %v115
  %166 = vmatprep.subr.mxu0 0.0
  %167 = vmatpush1.msra.mxu0 %v116
  %168 = vmatprep.subr.mxu0 0.0
  %169 = vmatpush1.msra.mxu0 %v117
  %170 = vmatprep.subr.mxu0 0.0
  %171 = vmatpush1.msra.mxu0 %v118
  %172 = vmatprep.subr.mxu0 0.0
  %173 = vmatpush1.msra.mxu0 %v119
  %174 = vmatprep.subr.mxu0 0.0
  %175 = vmatpush1.msra.mxu0 %v120
  %176 = vmatprep.subr.mxu0 0.0
  %177 = vmatpush1.msra.mxu0 %v121
  %178 = vmatprep.subr.mxu0 0.0
  %179 = vmatpush1.msra.mxu0 %v122
  %180 = vmatprep.subr.mxu0 0.0
  %181 = vmatpush1.msra.mxu0 %v123
  %182 = vmatprep.subr.mxu0 0.0
  %183 = vmatpush1.msra.mxu0 %v124
  %184 = vmatprep.subr.mxu0 0.0
  %185 = vmatpush1.msra.mxu0 %v125
  %186 = vmatprep.subr.mxu0 0.0
  %187 = vmatpush1.msra.mxu0 %v126
  %188 = vmatprep.subr.mxu0 0.0
  %189 = vmatpush1.msra.mxu0 %v127
  %190 = vmatprep.subr.mxu0 0.0
  %191 = vmatpush1.msra.mxu0 %v128
  %192 = vmatprep.subr.mxu0 0.0
  %193 = vmatpush1.msra.mxu0 %v129
  %194 = vmatprep.subr.mxu0 0.0
  %195 = vmatpush1.msra.mxu0 %v130
  %196 = vmatprep.subr.mxu0 0.0
  %197 = vmatpush1.msra.mxu0 %v131
  %198 = vmatprep.subr.mxu0 0.0
  %199 = vmatpush1.msra.mxu0 %v132
  %200 = vmatprep.subr.mxu0 0.0
  %201 = vmatpush1.msra.mxu0 %v133
  %202 = vmatprep.subr.mxu0 0.0
  %203 = vmatpush1.msra.mxu0 %v134
  %204 = vmatprep.subr.mxu0 0.0
  %205 = vmatpush1.msra.mxu0 %v135
  %206 = vmatprep.subr.mxu0 0.0
  %207 = vmatpush1.msra.mxu0 %v136
  %208 = vmatprep.subr.mxu0 0.0
  %209 = vmatpush1.msra.mxu0 %v137
  %210 = vmatprep.subr.mxu0 0.0
  %211 = vmatpush1.msra.mxu0 %v138
  %212 = vmatprep.subr.mxu0 0.0
  %213 = vmatpush1.msra.mxu0 %v139
  %214 = vmatprep.subr.mxu0 0.0
  %215 = vmatpush1.msra.mxu0 %v140
  %216 = vmatprep.subr.mxu0 0.0
  %217 = vmatpush1.msra.mxu0 %v141
  %218 = vmatprep.subr.mxu0 0.0
  %219 = vmatpush1.msra.mxu0 %v142
  %220 = vmatprep.subr.mxu0 0.0
  %221 = vmatpush1.msra.mxu0 %v143
  %222 = vmatprep.subr.mxu0 0.0
  %223 = vmatpush1.msra.mxu0 %v144
  %224 = vmatprep.subr.mxu0 0.0
  %225 = vmatpush1.msra.mxu0 %v145
  %226 = vmatprep.mubr.f32.mxu0 %v23
  %227 = vmatmul.mubr.f32.gmra.mrb[0].mxu0 %v93
  %v228 = vpop.f32.mrb[0].mxu0
  %v229 = vadd.f32 0.0, %v228
  %v230 = vpop.f32.mrb[0].mxu0
  %231 = vmatprep.mubr.f32.mxu0 %v24
  %232 = vmatmul.mubr.f32.gmra.mrb[0].mxu0 %v94
  %v233 = vpop.f32.mrb[0].mxu0
  %v234 = vadd.f32 0.0, %v233
  %v235 = vpop.f32.mrb[0].mxu0
  %236 = vmatprep.mubr.f32.mxu0 %v25
  %237 = vmatmul.mubr.f32.gmra.mrb[0].mxu0 %v95
  %v238 = vpop.f32.mrb[0].mxu0
  %v239 = vadd.f32 0.0, %v238
  %v240 = vpop.f32.mrb[0].mxu0
  %241 = vmatprep.mubr.f32.mxu0 %v26
  %242 = vmatmul.mubr.f32.gmra.mrb[0].mxu0 %v96
  %v243 = vpop.f32.mrb[0].mxu0
  %v244 = vadd.f32 0.0, %v243
  %v245 = vpop.f32.mrb[0].mxu0
  %246 = vdwg.mxu0
  %247 = vmatprep.subr.mxu0 0.0
  %248 = vmatpush1.msra.mxu0 %v146
  %249 = vmatprep.subr.mxu0 0.0
  %250 = vmatpush1.msra.mxu0 %v147
  %251 = vmatprep.subr.mxu0 0.0
  %252 = vmatpush1.msra.mxu0 %v148
  %253 = vmatprep.subr.mxu0 0.0
  %254 = vmatpush1.msra.mxu0 %v149
  %255 = vmatprep.subr.mxu0 0.0
  %256 = vmatpush1.msra.mxu0 %v150
  %257 = vmatprep.subr.mxu0 0.0
  %258 = vmatpush1.msra.mxu0 %v151
  %259 = vmatprep.subr.mxu0 0.0
  %260 = vmatpush1.msra.mxu0 %v152
  %261 = vmatprep.subr.mxu0 0.0
  %262 = vmatpush1.msra.mxu0 %v153
  %263 = vmatprep.subr.mxu0 0.0
  %264 = vmatpush1.msra.mxu0 %v154
  %265 = vmatprep.subr.mxu0 0.0
  %266 = vmatpush1.msra.mxu0 %v155
  %267 = vmatprep.subr.mxu0 0.0
  %268 = vmatpush1.msra.mxu0 %v156
  %269 = vmatprep.subr.mxu0 0.0
  %270 = vmatpush1.msra.mxu0 %v157
  %271 = vmatprep.subr.mxu0 0.0
  %272 = vmatpush1.msra.mxu0 %v158
  %273 = vmatprep.subr.mxu0 0.0
  %274 = vmatpush1.msra.mxu0 %v159
  %275 = vmatprep.subr.mxu0 0.0
  %276 = vmatpush1.msra.mxu0 %v160
  %277 = vmatprep.subr.mxu0 0.0
  %278 = vmatpush1.msra.mxu0 %v161
  %279 = vmatprep.subr.mxu0 0.0
  %280 = vmatpush1.msra.mxu0 0.0
  %281 = vmatprep.subr.mxu0 0.0
  %282 = vmatpush1.msra.mxu0 0.0
  %283 = vmatprep.subr.mxu0 0.0
  %284 = vmatpush1.msra.mxu0 0.0
  %285 = vmatprep.subr.mxu0 0.0
  %286 = vmatpush1.msra.mxu0 0.0
  %287 = vmatprep.subr.mxu0 0.0
  %288 = vmatpush1.msra.mxu0 0.0
  %289 = vmatprep.subr.mxu0 0.0
  %290 = vmatpush1.msra.mxu0 0.0
  %291 = vmatprep.subr.mxu0 0.0
  %292 = vmatpush1.msra.mxu0 0.0
  %293 = vmatprep.subr.mxu0 0.0
  %294 = vmatpush1.msra.mxu0 0.0
  %295 = vmatprep.subr.mxu0 0.0
  %296 = vmatpush1.msra.mxu0 0.0
  %297 = vmatprep.subr.mxu0 0.0
  %298 = vmatpush1.msra.mxu0 0.0
  %299 = vmatprep.subr.mxu0 0.0
  %300 = vmatpush1.msra.mxu0 0.0
  %301 = vmatprep.subr.mxu0 0.0
  %302 = vmatpush1.msra.mxu0 0.0
  %303 = vmatprep.subr.mxu0 0.0
  %304 = vmatpush1.msra.mxu0 0.0
  %305 = vmatprep.subr.mxu0 0.0
  %306 = vmatpush1.msra.mxu0 0.0
  %307 = vmatprep.subr.mxu0 0.0
  %308 = vmatpush1.msra.mxu0 0.0
  %309 = vmatprep.subr.mxu0 0.0
  %310 = vmatpush1.msra.mxu0 0.0
  %311 = vmatprep.mubr.f32.mxu0 0.0
  %312 = vmatmul.mubr.f32.gmra.mrb[0].mxu0 %v110
  %v313 = vpop.f32.mrb[0].mxu0
  %v314 = vadd.f32 %v229, %v313
  %v315 = vpop.f32.mrb[0].mxu0
  %316 = vmatprep.mubr.f32.mxu0 0.0
  %317 = vmatmul.mubr.f32.gmra.mrb[0].mxu0 %v111
  %v318 = vpop.f32.mrb[0].mxu0
  %v319 = vadd.f32 %v234, %v318
  %v320 = vpop.f32.mrb[0].mxu0
  %321 = vmatprep.mubr.f32.mxu0 0.0
  %322 = vmatmul.mubr.f32.gmra.mrb[0].mxu0 %v112
  %v323 = vpop.f32.mrb[0].mxu0
  %v324 = vadd.f32 %v239, %v323
  %v325 = vpop.f32.mrb[0].mxu0
  %326 = vmatprep.mubr.f32.mxu0 0.0
  %327 = vmatmul.mubr.f32.gmra.mrb[0].mxu0 %v113
  %v328 = vpop.f32.mrb[0].mxu0
  %v329 = vadd.f32 %v244, %v328
  %v330 = vpop.f32.mrb[0].mxu0
  %331 = vdwg.mxu0
  %v332 = vadd.f32 %v314, %v319
  %v333 = vadd.f32 %v332, %v324
  %v334 = vadd.f32 %v333, %v329
  %v335 = vrot.slane %v334, 4
  %v336 = vadd.f32 %v334, %v335
  %v337 = vrot.slane %v336, 2
  %v338 = vadd.f32 %v336, %v337
  %v339 = vrot.slane %v338, 1
  %v340 = vadd.f32 %v338, %v339
  %v341 = vmul.f32 %v314, %v314
  %v342 = vmul.f32 %v319, %v319
  %v343 = vmul.f32 %v324, %v324
  %v344 = vmul.f32 %v329, %v329
  %v345 = vadd.f32 %v341, %v342
  %v346 = vadd.f32 %v345, %v343
  %v347 = vadd.f32 %v346, %v344
  %v348 = vrot.slane %v347, 4
  %v349 = vadd.f32 %v347, %v348
  %v350 = vrot.slane %v349, 2
  %v351 = vadd.f32 %v349, %v350
  %v352 = vrot.slane %v351, 1
  %v353 = vadd.f32 %v351, %v352
  %vm354 = vcmask 1040384
  %v355 = vsel %vm354, %v340, %v353
  %v356 = vld [vmem:[%s5] sm:$0xff]
  %v357 = vld [vmem:[%s5 + $0x8] sm:$0xff]
  %v358 = vld [vmem:[%s5 + $0x10] sm:$0xff]
  %v359 = vld [vmem:[%s5 + $0x18] sm:$0xff]
  %v360 = vld [vmem:[%s5 + $0x20] sm:$0xff]
  %v361 = vld [vmem:[%s5 + $0x28] sm:$0xff]
  %v362 = vld [vmem:[%s5 + $0x30] sm:$0xff]
  %v363 = vld [vmem:[%s5 + $0x38] sm:$0xff]
  %v364 = vld [vmem:[%s5 + $0x40] sm:$0xff]
  %v365 = vld [vmem:[%s5 + $0x48] sm:$0xff]
  %v366 = vld [vmem:[%s5 + $0x50] sm:$0xff]
  %v367 = vld [vmem:[%s5 + $0x58] sm:$0xff]
  %v368 = vld [vmem:[%s5 + $0x60] sm:$0xff]
  %v369 = vld [vmem:[%s5 + $0x68] sm:$0xff]
  %v370 = vld [vmem:[%s5 + $0x70] sm:$0xff]
  %v371 = vld [vmem:[%s5 + $0x78] sm:$0xff]
  %372 = vmatprep.subr.mxu0 0.0
  %373 = vmatpush1.msra.mxu0 %v356
  %374 = vmatprep.subr.mxu0 0.0
  %375 = vmatpush1.msra.mxu0 %v357
  %376 = vmatprep.subr.mxu0 0.0
  %377 = vmatpush1.msra.mxu0 %v358
  %378 = vmatprep.subr.mxu0 0.0
  %379 = vmatpush1.msra.mxu0 %v359
  %380 = vmatprep.subr.mxu0 0.0
  %381 = vmatpush1.msra.mxu0 %v360
  %382 = vmatprep.subr.mxu0 0.0
  %383 = vmatpush1.msra.mxu0 %v361
  %384 = vmatprep.subr.mxu0 0.0
  %385 = vmatpush1.msra.mxu0 %v362
  %386 = vmatprep.subr.mxu0 0.0
  %387 = vmatpush1.msra.mxu0 %v363
  %388 = vmatprep.subr.mxu0 0.0
  %389 = vmatpush1.msra.mxu0 %v364
  %390 = vmatprep.subr.mxu0 0.0
  %391 = vmatpush1.msra.mxu0 %v365
  %392 = vmatprep.subr.mxu0 0.0
  %393 = vmatpush1.msra.mxu0 %v366
  %394 = vmatprep.subr.mxu0 0.0
  %395 = vmatpush1.msra.mxu0 %v367
  %396 = vmatprep.subr.mxu0 0.0
  %397 = vmatpush1.msra.mxu0 %v368
  %398 = vmatprep.subr.mxu0 0.0
  %399 = vmatpush1.msra.mxu0 %v369
  %400 = vmatprep.subr.mxu0 0.0
  %401 = vmatpush1.msra.mxu0 %v370
  %402 = vmatprep.subr.mxu0 0.0
  %403 = vmatpush1.msra.mxu0 %v371
  %404 = vmatprep.subr.mxu0 0.0
  %405 = vmatpush1.msra.mxu0 0.0
  %406 = vmatprep.subr.mxu0 0.0
  %407 = vmatpush1.msra.mxu0 0.0
  %408 = vmatprep.subr.mxu0 0.0
  %409 = vmatpush1.msra.mxu0 0.0
  %410 = vmatprep.subr.mxu0 0.0
  %411 = vmatpush1.msra.mxu0 0.0
  %412 = vmatprep.subr.mxu0 0.0
  %413 = vmatpush1.msra.mxu0 0.0
  %414 = vmatprep.subr.mxu0 0.0
  %415 = vmatpush1.msra.mxu0 0.0
  %416 = vmatprep.subr.mxu0 0.0
  %417 = vmatpush1.msra.mxu0 0.0
  %418 = vmatprep.subr.mxu0 0.0
  %419 = vmatpush1.msra.mxu0 0.0
  %420 = vmatprep.subr.mxu0 0.0
  %421 = vmatpush1.msra.mxu0 0.0
  %422 = vmatprep.subr.mxu0 0.0
  %423 = vmatpush1.msra.mxu0 0.0
  %424 = vmatprep.subr.mxu0 0.0
  %425 = vmatpush1.msra.mxu0 0.0
  %426 = vmatprep.subr.mxu0 0.0
  %427 = vmatpush1.msra.mxu0 0.0
  %428 = vmatprep.subr.mxu0 0.0
  %429 = vmatpush1.msra.mxu0 0.0
  %430 = vmatprep.subr.mxu0 0.0
  %431 = vmatpush1.msra.mxu0 0.0
  %432 = vmatprep.subr.mxu0 0.0
  %433 = vmatpush1.msra.mxu0 0.0
  %434 = vmatprep.subr.mxu0 0.0
  %435 = vmatpush1.msra.mxu0 0.0
  %436 = vmatprep.mubr.f32.mxu0 0.0
  %437 = vmatmul.mubr.f32.gmra.mrb[0].mxu0 %v355
  %v438 = vpop.f32.mrb[0].mxu0
  %v439 = vadd.f32 0.0, %v438
  %v440 = vpop.f32.mrb[0].mxu0
  %441 = vdwg.mxu0
  %v442 = vmul.f32 %v439, %v439
  %v444 = vrot.slane %v442, 7
  %v446 = vsub.f32 %v439, %v444
  %v447 = vadd.f32 %v446, 1e-05
  %v448 = vrsqrt.pop %v447
  %v449 = vld [vmem:[%s4] sm:$0x1]
  %v450 = vld [vmem:[%s4 + $0x1] sm:$0x1]
  %v452 = vrot.slane %v448, 1
  %v454 = vmul.f32 %v449, %v452
  %v455 = vmul.f32 %v439, %v454
  %v456 = vsub.f32 %v450, %v455
  %v457 = vlaneseq
  %v458 = vshrl.u32 %v457, 7
  %v459 = vsub.s32 0, %v458
  %v460 = vrot.slane %v454, %v459
  %v461 = vmul.f32 %v314, %v460
  %v462 = vmul.f32 %v319, %v460
  %v463 = vmul.f32 %v324, %v460
  %v464 = vmul.f32 %v329, %v460
  %v465 = vlaneseq
  %v466 = vshrl.u32 %v465, 7
  %v467 = vsub.s32 0, %v466
  %v468 = vrot.slane %v456, %v467
  %v469 = vadd.f32 %v461, %v468
  %v470 = vadd.f32 %v462, %v468
  %v471 = vadd.f32 %v463, %v468
  %v472 = vadd.f32 %v464, %v468
  %v473 = vmax.f32 %v469, 0.0
  %v474 = vmax.f32 %v470, 0.0
  %v475 = vmax.f32 %v471, 0.0
  %v476 = vmax.f32 %v472, 0.0
  %v477 = vrot.slane %v473, 7
  %v478 = vrot.slane %v474, 7
  %v479 = vrot.slane %v475, 7
  %v480 = vrot.slane %v476, 7
  %v481 = vsel %vm88, %v479, %v480
  %v482 = vsel %vm88, %v478, %v479
  %v483 = vsel %vm88, %v477, %v478
  %v484 = vsel %vm88, %v480, %v477
  %v485 = vsel %vm80, %v484, 0.0
  %v486 = vsel %vm81, %v483, 0.0
  %v487 = vsel %vm82, %v482, 0.0
  %v488 = vsel %vm83, %v481, 0.0
  %v489 = vrot.slane %v473, 1
  %v490 = vrot.slane %v474, 1
  %v491 = vrot.slane %v475, 1
  %v492 = vrot.slane %v476, 1
  %v493 = vsel %vm105, %v491, %v492
  %v494 = vsel %vm105, %v490, %v491
  %v495 = vsel %vm105, %v489, %v490
  %v496 = vsel %vm105, %v492, %v489
  %v497 = vsel %vm97, %v495, 0.0
  %v498 = vsel %vm98, %v494, 0.0
  %v499 = vsel %vm99, %v493, 0.0
  %v500 = vsel %vm100, %v496, 0.0
  %v501 = vld [vmem:[%s2] sm:$0xff]
  %v502 = vld [vmem:[%s2 + $0x8] sm:$0xff]
  %v503 = vld [vmem:[%s2 + $0x10] sm:$0xff]
  %v504 = vld [vmem:[%s2 + $0x18] sm:$0xff]
  %v505 = vld [vmem:[%s2 + $0x20] sm:$0xff]
  %v506 = vld [vmem:[%s2 + $0x28] sm:$0xff]
  %v507 = vld [vmem:[%s2 + $0x30] sm:$0xff]
  %v508 = vld [vmem:[%s2 + $0x38] sm:$0xff]
  %v509 = vld [vmem:[%s2 + $0x40] sm:$0xff]
  %v510 = vld [vmem:[%s2 + $0x48] sm:$0xff]
  %v511 = vld [vmem:[%s2 + $0x50] sm:$0xff]
  %v512 = vld [vmem:[%s2 + $0x58] sm:$0xff]
  %v513 = vld [vmem:[%s2 + $0x60] sm:$0xff]
  %v514 = vld [vmem:[%s2 + $0x68] sm:$0xff]
  %v515 = vld [vmem:[%s2 + $0x70] sm:$0xff]
  %v516 = vld [vmem:[%s2 + $0x78] sm:$0xff]
  %v517 = vld [vmem:[%s2 + $0x80] sm:$0xff]
  %v518 = vld [vmem:[%s2 + $0x88] sm:$0xff]
  %v519 = vld [vmem:[%s2 + $0x90] sm:$0xff]
  %v520 = vld [vmem:[%s2 + $0x98] sm:$0xff]
  %v521 = vld [vmem:[%s2 + $0xa0] sm:$0xff]
  %v522 = vld [vmem:[%s2 + $0xa8] sm:$0xff]
  %v523 = vld [vmem:[%s2 + $0xb0] sm:$0xff]
  %v524 = vld [vmem:[%s2 + $0xb8] sm:$0xff]
  %v525 = vld [vmem:[%s2 + $0xc0] sm:$0xff]
  %v526 = vld [vmem:[%s2 + $0xc8] sm:$0xff]
  %v527 = vld [vmem:[%s2 + $0xd0] sm:$0xff]
  %v528 = vld [vmem:[%s2 + $0xd8] sm:$0xff]
  %v529 = vld [vmem:[%s2 + $0xe0] sm:$0xff]
  %v530 = vld [vmem:[%s2 + $0xe8] sm:$0xff]
  %v531 = vld [vmem:[%s2 + $0xf0] sm:$0xff]
  %v532 = vld [vmem:[%s2 + $0xf8] sm:$0xff]
  %v533 = vld [vmem:[%s2 + $0x100] sm:$0xff]
  %v534 = vld [vmem:[%s2 + $0x108] sm:$0xff]
  %v535 = vld [vmem:[%s2 + $0x110] sm:$0xff]
  %v536 = vld [vmem:[%s2 + $0x118] sm:$0xff]
  %v537 = vld [vmem:[%s2 + $0x120] sm:$0xff]
  %v538 = vld [vmem:[%s2 + $0x128] sm:$0xff]
  %v539 = vld [vmem:[%s2 + $0x130] sm:$0xff]
  %v540 = vld [vmem:[%s2 + $0x138] sm:$0xff]
  %v541 = vld [vmem:[%s2 + $0x140] sm:$0xff]
  %v542 = vld [vmem:[%s2 + $0x148] sm:$0xff]
  %v543 = vld [vmem:[%s2 + $0x150] sm:$0xff]
  %v544 = vld [vmem:[%s2 + $0x158] sm:$0xff]
  %v545 = vld [vmem:[%s2 + $0x160] sm:$0xff]
  %v546 = vld [vmem:[%s2 + $0x168] sm:$0xff]
  %v547 = vld [vmem:[%s2 + $0x170] sm:$0xff]
  %v548 = vld [vmem:[%s2 + $0x178] sm:$0xff]
  %549 = vmatprep.subr.mxu0 0.0
  %550 = vmatpush1.msra.mxu0 %v501
  %551 = vmatprep.subr.mxu0 0.0
  %552 = vmatpush1.msra.mxu0 %v502
  %553 = vmatprep.subr.mxu0 0.0
  %554 = vmatpush1.msra.mxu0 %v503
  %555 = vmatprep.subr.mxu0 0.0
  %556 = vmatpush1.msra.mxu0 %v504
  %557 = vmatprep.subr.mxu0 0.0
  %558 = vmatpush1.msra.mxu0 %v505
  %559 = vmatprep.subr.mxu0 0.0
  %560 = vmatpush1.msra.mxu0 %v506
  %561 = vmatprep.subr.mxu0 0.0
  %562 = vmatpush1.msra.mxu0 %v507
  %563 = vmatprep.subr.mxu0 0.0
  %564 = vmatpush1.msra.mxu0 %v508
  %565 = vmatprep.subr.mxu0 0.0
  %566 = vmatpush1.msra.mxu0 %v509
  %567 = vmatprep.subr.mxu0 0.0
  %568 = vmatpush1.msra.mxu0 %v510
  %569 = vmatprep.subr.mxu0 0.0
  %570 = vmatpush1.msra.mxu0 %v511
  %571 = vmatprep.subr.mxu0 0.0
  %572 = vmatpush1.msra.mxu0 %v512
  %573 = vmatprep.subr.mxu0 0.0
  %574 = vmatpush1.msra.mxu0 %v513
  %575 = vmatprep.subr.mxu0 0.0
  %576 = vmatpush1.msra.mxu0 %v514
  %577 = vmatprep.subr.mxu0 0.0
  %578 = vmatpush1.msra.mxu0 %v515
  %579 = vmatprep.subr.mxu0 0.0
  %580 = vmatpush1.msra.mxu0 %v516
  %581 = vmatprep.subr.mxu0 0.0
  %582 = vmatpush1.msra.mxu0 %v517
  %583 = vmatprep.subr.mxu0 0.0
  %584 = vmatpush1.msra.mxu0 %v518
  %585 = vmatprep.subr.mxu0 0.0
  %586 = vmatpush1.msra.mxu0 %v519
  %587 = vmatprep.subr.mxu0 0.0
  %588 = vmatpush1.msra.mxu0 %v520
  %589 = vmatprep.subr.mxu0 0.0
  %590 = vmatpush1.msra.mxu0 %v521
  %591 = vmatprep.subr.mxu0 0.0
  %592 = vmatpush1.msra.mxu0 %v522
  %593 = vmatprep.subr.mxu0 0.0
  %594 = vmatpush1.msra.mxu0 %v523
  %595 = vmatprep.subr.mxu0 0.0
  %596 = vmatpush1.msra.mxu0 %v524
  %597 = vmatprep.subr.mxu0 0.0
  %598 = vmatpush1.msra.mxu0 %v525
  %599 = vmatprep.subr.mxu0 0.0
  %600 = vmatpush1.msra.mxu0 %v526
  %601 = vmatprep.subr.mxu0 0.0
  %602 = vmatpush1.msra.mxu0 %v527
  %603 = vmatprep.subr.mxu0 0.0
  %604 = vmatpush1.msra.mxu0 %v528
  %605 = vmatprep.subr.mxu0 0.0
  %606 = vmatpush1.msra.mxu0 %v529
  %607 = vmatprep.subr.mxu0 0.0
  %608 = vmatpush1.msra.mxu0 %v530
  %609 = vmatprep.subr.mxu0 0.0
  %610 = vmatpush1.msra.mxu0 %v531
  %611 = vmatprep.subr.mxu0 0.0
  %612 = vmatpush1.msra.mxu0 %v532
  %613 = vmatprep.mubr.f32.mxu0 %v473
  %614 = vmatmul.mubr.f32.gmra.mrb[0].mxu0 %v485
  %v615 = vpop.f32.mrb[0].mxu0
  %v616 = vadd.f32 0.0, %v615
  %v617 = vpop.f32.mrb[0].mxu0
  %618 = vmatprep.mubr.f32.mxu0 %v474
  %619 = vmatmul.mubr.f32.gmra.mrb[0].mxu0 %v486
  %v620 = vpop.f32.mrb[0].mxu0
  %v621 = vadd.f32 0.0, %v620
  %v622 = vpop.f32.mrb[0].mxu0
  %623 = vmatprep.mubr.f32.mxu0 %v475
  %624 = vmatmul.mubr.f32.gmra.mrb[0].mxu0 %v487
  %v625 = vpop.f32.mrb[0].mxu0
  %v626 = vadd.f32 0.0, %v625
  %v627 = vpop.f32.mrb[0].mxu0
  %628 = vmatprep.mubr.f32.mxu0 %v476
  %629 = vmatmul.mubr.f32.gmra.mrb[0].mxu0 %v488
  %v630 = vpop.f32.mrb[0].mxu0
  %v631 = vadd.f32 0.0, %v630
  %v632 = vpop.f32.mrb[0].mxu0
  %633 = vdwg.mxu0
  %634 = vmatprep.subr.mxu0 0.0
  %635 = vmatpush1.msra.mxu0 %v533
  %636 = vmatprep.subr.mxu0 0.0
  %637 = vmatpush1.msra.mxu0 %v534
  %638 = vmatprep.subr.mxu0 0.0
  %639 = vmatpush1.msra.mxu0 %v535
  %640 = vmatprep.subr.mxu0 0.0
  %641 = vmatpush1.msra.mxu0 %v536
  %642 = vmatprep.subr.mxu0 0.0
  %643 = vmatpush1.msra.mxu0 %v537
  %644 = vmatprep.subr.mxu0 0.0
  %645 = vmatpush1.msra.mxu0 %v538
  %646 = vmatprep.subr.mxu0 0.0
  %647 = vmatpush1.msra.mxu0 %v539
  %648 = vmatprep.subr.mxu0 0.0
  %649 = vmatpush1.msra.mxu0 %v540
  %650 = vmatprep.subr.mxu0 0.0
  %651 = vmatpush1.msra.mxu0 %v541
  %652 = vmatprep.subr.mxu0 0.0
  %653 = vmatpush1.msra.mxu0 %v542
  %654 = vmatprep.subr.mxu0 0.0
  %655 = vmatpush1.msra.mxu0 %v543
  %656 = vmatprep.subr.mxu0 0.0
  %657 = vmatpush1.msra.mxu0 %v544
  %658 = vmatprep.subr.mxu0 0.0
  %659 = vmatpush1.msra.mxu0 %v545
  %660 = vmatprep.subr.mxu0 0.0
  %661 = vmatpush1.msra.mxu0 %v546
  %662 = vmatprep.subr.mxu0 0.0
  %663 = vmatpush1.msra.mxu0 %v547
  %664 = vmatprep.subr.mxu0 0.0
  %665 = vmatpush1.msra.mxu0 %v548
  %666 = vmatprep.subr.mxu0 0.0
  %667 = vmatpush1.msra.mxu0 0.0
  %668 = vmatprep.subr.mxu0 0.0
  %669 = vmatpush1.msra.mxu0 0.0
  %670 = vmatprep.subr.mxu0 0.0
  %671 = vmatpush1.msra.mxu0 0.0
  %672 = vmatprep.subr.mxu0 0.0
  %673 = vmatpush1.msra.mxu0 0.0
  %674 = vmatprep.subr.mxu0 0.0
  %675 = vmatpush1.msra.mxu0 0.0
  %676 = vmatprep.subr.mxu0 0.0
  %677 = vmatpush1.msra.mxu0 0.0
  %678 = vmatprep.subr.mxu0 0.0
  %679 = vmatpush1.msra.mxu0 0.0
  %680 = vmatprep.subr.mxu0 0.0
  %681 = vmatpush1.msra.mxu0 0.0
  %682 = vmatprep.subr.mxu0 0.0
  %683 = vmatpush1.msra.mxu0 0.0
  %684 = vmatprep.subr.mxu0 0.0
  %685 = vmatpush1.msra.mxu0 0.0
  %686 = vmatprep.subr.mxu0 0.0
  %687 = vmatpush1.msra.mxu0 0.0
  %688 = vmatprep.subr.mxu0 0.0
  %689 = vmatpush1.msra.mxu0 0.0
  %690 = vmatprep.subr.mxu0 0.0
  %691 = vmatpush1.msra.mxu0 0.0
  %692 = vmatprep.subr.mxu0 0.0
  %693 = vmatpush1.msra.mxu0 0.0
  %694 = vmatprep.subr.mxu0 0.0
  %695 = vmatpush1.msra.mxu0 0.0
  %696 = vmatprep.subr.mxu0 0.0
  %697 = vmatpush1.msra.mxu0 0.0
  %698 = vmatprep.mubr.f32.mxu0 0.0
  %699 = vmatmul.mubr.f32.gmra.mrb[0].mxu0 %v497
  %v700 = vpop.f32.mrb[0].mxu0
  %v701 = vadd.f32 %v616, %v700
  %v702 = vpop.f32.mrb[0].mxu0
  %703 = vmatprep.mubr.f32.mxu0 0.0
  %704 = vmatmul.mubr.f32.gmra.mrb[0].mxu0 %v498
  %v705 = vpop.f32.mrb[0].mxu0
  %v706 = vadd.f32 %v621, %v705
  %v707 = vpop.f32.mrb[0].mxu0
  %708 = vmatprep.mubr.f32.mxu0 0.0
  %709 = vmatmul.mubr.f32.gmra.mrb[0].mxu0 %v499
  %v710 = vpop.f32.mrb[0].mxu0
  %v711 = vadd.f32 %v626, %v710
  %v712 = vpop.f32.mrb[0].mxu0
  %713 = vmatprep.mubr.f32.mxu0 0.0
  %714 = vmatmul.mubr.f32.gmra.mrb[0].mxu0 %v500
  %v715 = vpop.f32.mrb[0].mxu0
  %v716 = vadd.f32 %v631, %v715
  %v717 = vpop.f32.mrb[0].mxu0
  %718 = vdwg.mxu0
  %v719 = vadd.f32 %v701, %v706
  %v720 = vadd.f32 %v719, %v711
  %v721 = vadd.f32 %v720, %v716
  %v722 = vrot.slane %v721, 4
  %v723 = vadd.f32 %v721, %v722
  %v724 = vrot.slane %v723, 2
  %v725 = vadd.f32 %v723, %v724
  %v726 = vrot.slane %v725, 1
  %v727 = vadd.f32 %v725, %v726
  %v728 = vmul.f32 %v701, %v701
  %v729 = vmul.f32 %v706, %v706
  %v730 = vmul.f32 %v711, %v711
  %v731 = vmul.f32 %v716, %v716
  %v732 = vadd.f32 %v728, %v729
  %v733 = vadd.f32 %v732, %v730
  %v734 = vadd.f32 %v733, %v731
  %v735 = vrot.slane %v734, 4
  %v736 = vadd.f32 %v734, %v735
  %v737 = vrot.slane %v736, 2
  %v738 = vadd.f32 %v736, %v737
  %v739 = vrot.slane %v738, 1
  %v740 = vadd.f32 %v738, %v739
  %v741 = vsel %vm354, %v727, %v740
  %742 = vmatprep.subr.mxu0 0.0
  %743 = vmatpush1.msra.mxu0 %v356
  %744 = vmatprep.subr.mxu0 0.0
  %745 = vmatpush1.msra.mxu0 %v357
  %746 = vmatprep.subr.mxu0 0.0
  %747 = vmatpush1.msra.mxu0 %v358
  %748 = vmatprep.subr.mxu0 0.0
  %749 = vmatpush1.msra.mxu0 %v359
  %750 = vmatprep.subr.mxu0 0.0
  %751 = vmatpush1.msra.mxu0 %v360
  %752 = vmatprep.subr.mxu0 0.0
  %753 = vmatpush1.msra.mxu0 %v361
  %754 = vmatprep.subr.mxu0 0.0
  %755 = vmatpush1.msra.mxu0 %v362
  %756 = vmatprep.subr.mxu0 0.0
  %757 = vmatpush1.msra.mxu0 %v363
  %758 = vmatprep.subr.mxu0 0.0
  %759 = vmatpush1.msra.mxu0 %v364
  %760 = vmatprep.subr.mxu0 0.0
  %761 = vmatpush1.msra.mxu0 %v365
  %762 = vmatprep.subr.mxu0 0.0
  %763 = vmatpush1.msra.mxu0 %v366
  %764 = vmatprep.subr.mxu0 0.0
  %765 = vmatpush1.msra.mxu0 %v367
  %766 = vmatprep.subr.mxu0 0.0
  %767 = vmatpush1.msra.mxu0 %v368
  %768 = vmatprep.subr.mxu0 0.0
  %769 = vmatpush1.msra.mxu0 %v369
  %770 = vmatprep.subr.mxu0 0.0
  %771 = vmatpush1.msra.mxu0 %v370
  %772 = vmatprep.subr.mxu0 0.0
  %773 = vmatpush1.msra.mxu0 %v371
  %774 = vmatprep.subr.mxu0 0.0
  %775 = vmatpush1.msra.mxu0 0.0
  %776 = vmatprep.subr.mxu0 0.0
  %777 = vmatpush1.msra.mxu0 0.0
  %778 = vmatprep.subr.mxu0 0.0
  %779 = vmatpush1.msra.mxu0 0.0
  %780 = vmatprep.subr.mxu0 0.0
  %781 = vmatpush1.msra.mxu0 0.0
  %782 = vmatprep.subr.mxu0 0.0
  %783 = vmatpush1.msra.mxu0 0.0
  %784 = vmatprep.subr.mxu0 0.0
  %785 = vmatpush1.msra.mxu0 0.0
  %786 = vmatprep.subr.mxu0 0.0
  %787 = vmatpush1.msra.mxu0 0.0
  %788 = vmatprep.subr.mxu0 0.0
  %789 = vmatpush1.msra.mxu0 0.0
  %790 = vmatprep.subr.mxu0 0.0
  %791 = vmatpush1.msra.mxu0 0.0
  %792 = vmatprep.subr.mxu0 0.0
  %793 = vmatpush1.msra.mxu0 0.0
  %794 = vmatprep.subr.mxu0 0.0
  %795 = vmatpush1.msra.mxu0 0.0
  %796 = vmatprep.subr.mxu0 0.0
  %797 = vmatpush1.msra.mxu0 0.0
  %798 = vmatprep.subr.mxu0 0.0
  %799 = vmatpush1.msra.mxu0 0.0
  %800 = vmatprep.subr.mxu0 0.0
  %801 = vmatpush1.msra.mxu0 0.0
  %802 = vmatprep.subr.mxu0 0.0
  %803 = vmatpush1.msra.mxu0 0.0
  %804 = vmatprep.subr.mxu0 0.0
  %805 = vmatpush1.msra.mxu0 0.0
  %806 = vmatprep.mubr.f32.mxu0 0.0
  %807 = vmatmul.mubr.f32.gmra.mrb[0].mxu0 %v741
  %v808 = vpop.f32.mrb[0].mxu0
  %v809 = vadd.f32 0.0, %v808
  %v810 = vpop.f32.mrb[0].mxu0
  %811 = vdwg.mxu0
  %v812 = vmul.f32 %v809, %v809
  %v814 = vrot.slane %v812, 7
  %v816 = vsub.f32 %v809, %v814
  %v817 = vadd.f32 %v816, 1e-05
  %v818 = vrsqrt.pop %v817
  %v819 = vld [vmem:[%s4 + $0x2] sm:$0x1]
  %v820 = vld [vmem:[%s4 + $0x3] sm:$0x1]
  %v822 = vrot.slane %v818, 1
  %v824 = vmul.f32 %v819, %v822
  %v825 = vmul.f32 %v809, %v824
  %v826 = vsub.f32 %v820, %v825
  %v827 = vlaneseq
  %v828 = vshrl.u32 %v827, 7
  %v829 = vsub.s32 0, %v828
  %v830 = vrot.slane %v824, %v829
  %v831 = vmul.f32 %v701, %v830
  %v832 = vmul.f32 %v706, %v830
  %v833 = vmul.f32 %v711, %v830
  %v834 = vmul.f32 %v716, %v830
  %v835 = vlaneseq
  %v836 = vshrl.u32 %v835, 7
  %v837 = vsub.s32 0, %v836
  %v838 = vrot.slane %v826, %v837
  %v839 = vadd.f32 %v831, %v838
  %v840 = vadd.f32 %v832, %v838
  %v841 = vadd.f32 %v833, %v838
  %v842 = vadd.f32 %v834, %v838
  %v843 = vmax.f32 %v839, 0.0
  %v844 = vmax.f32 %v840, 0.0
  %v845 = vmax.f32 %v841, 0.0
  %v846 = vmax.f32 %v842, 0.0
  %v847 = vrot.slane %v843, 7
  %v848 = vrot.slane %v844, 7
  %v849 = vrot.slane %v845, 7
  %v850 = vrot.slane %v846, 7
  %v851 = vsel %vm88, %v849, %v850
  %v852 = vsel %vm88, %v848, %v849
  %v853 = vsel %vm88, %v847, %v848
  %v854 = vsel %vm88, %v850, %v847
  %v855 = vsel %vm80, %v854, 0.0
  %v856 = vsel %vm81, %v853, 0.0
  %v857 = vsel %vm82, %v852, 0.0
  %v858 = vsel %vm83, %v851, 0.0
  %v859 = vrot.slane %v843, 1
  %v860 = vrot.slane %v844, 1
  %v861 = vrot.slane %v845, 1
  %v862 = vrot.slane %v846, 1
  %v863 = vsel %vm105, %v861, %v862
  %v864 = vsel %vm105, %v860, %v861
  %v865 = vsel %vm105, %v859, %v860
  %v866 = vsel %vm105, %v862, %v859
  %v867 = vsel %vm97, %v865, 0.0
  %v868 = vsel %vm98, %v864, 0.0
  %v869 = vsel %vm99, %v863, 0.0
  %v870 = vsel %vm100, %v866, 0.0
  %v871 = vld [vmem:[%s3] sm:$0xff]
  %v872 = vld [vmem:[%s3 + $0x8] sm:$0xff]
  %v873 = vld [vmem:[%s3 + $0x10] sm:$0xff]
  %v874 = vld [vmem:[%s3 + $0x18] sm:$0xff]
  %v875 = vld [vmem:[%s3 + $0x20] sm:$0xff]
  %v876 = vld [vmem:[%s3 + $0x28] sm:$0xff]
  %v877 = vld [vmem:[%s3 + $0x30] sm:$0xff]
  %v878 = vld [vmem:[%s3 + $0x38] sm:$0xff]
  %v879 = vld [vmem:[%s3 + $0x40] sm:$0xff]
  %v880 = vld [vmem:[%s3 + $0x48] sm:$0xff]
  %v881 = vld [vmem:[%s3 + $0x50] sm:$0xff]
  %v882 = vld [vmem:[%s3 + $0x58] sm:$0xff]
  %v883 = vld [vmem:[%s3 + $0x60] sm:$0xff]
  %v884 = vld [vmem:[%s3 + $0x68] sm:$0xff]
  %v885 = vld [vmem:[%s3 + $0x70] sm:$0xff]
  %v886 = vld [vmem:[%s3 + $0x78] sm:$0xff]
  %v887 = vld [vmem:[%s3 + $0x80] sm:$0xff]
  %v888 = vld [vmem:[%s3 + $0x88] sm:$0xff]
  %v889 = vld [vmem:[%s3 + $0x90] sm:$0xff]
  %v890 = vld [vmem:[%s3 + $0x98] sm:$0xff]
  %v891 = vld [vmem:[%s3 + $0xa0] sm:$0xff]
  %v892 = vld [vmem:[%s3 + $0xa8] sm:$0xff]
  %v893 = vld [vmem:[%s3 + $0xb0] sm:$0xff]
  %v894 = vld [vmem:[%s3 + $0xb8] sm:$0xff]
  %v895 = vld [vmem:[%s3 + $0xc0] sm:$0xff]
  %v896 = vld [vmem:[%s3 + $0xc8] sm:$0xff]
  %v897 = vld [vmem:[%s3 + $0xd0] sm:$0xff]
  %v898 = vld [vmem:[%s3 + $0xd8] sm:$0xff]
  %v899 = vld [vmem:[%s3 + $0xe0] sm:$0xff]
  %v900 = vld [vmem:[%s3 + $0xe8] sm:$0xff]
  %v901 = vld [vmem:[%s3 + $0xf0] sm:$0xff]
  %v902 = vld [vmem:[%s3 + $0xf8] sm:$0xff]
  %v903 = vld [vmem:[%s3 + $0x100] sm:$0xff]
  %v904 = vld [vmem:[%s3 + $0x108] sm:$0xff]
  %v905 = vld [vmem:[%s3 + $0x110] sm:$0xff]
  %v906 = vld [vmem:[%s3 + $0x118] sm:$0xff]
  %v907 = vld [vmem:[%s3 + $0x120] sm:$0xff]
  %v908 = vld [vmem:[%s3 + $0x128] sm:$0xff]
  %v909 = vld [vmem:[%s3 + $0x130] sm:$0xff]
  %v910 = vld [vmem:[%s3 + $0x138] sm:$0xff]
  %v911 = vld [vmem:[%s3 + $0x140] sm:$0xff]
  %v912 = vld [vmem:[%s3 + $0x148] sm:$0xff]
  %v913 = vld [vmem:[%s3 + $0x150] sm:$0xff]
  %v914 = vld [vmem:[%s3 + $0x158] sm:$0xff]
  %v915 = vld [vmem:[%s3 + $0x160] sm:$0xff]
  %v916 = vld [vmem:[%s3 + $0x168] sm:$0xff]
  %v917 = vld [vmem:[%s3 + $0x170] sm:$0xff]
  %v918 = vld [vmem:[%s3 + $0x178] sm:$0xff]
  %919 = vmatprep.subr.mxu0 0.0
  %920 = vmatpush1.msra.mxu0 %v871
  %921 = vmatprep.subr.mxu0 0.0
  %922 = vmatpush1.msra.mxu0 %v872
  %923 = vmatprep.subr.mxu0 0.0
  %924 = vmatpush1.msra.mxu0 %v873
  %925 = vmatprep.subr.mxu0 0.0
  %926 = vmatpush1.msra.mxu0 %v874
  %927 = vmatprep.subr.mxu0 0.0
  %928 = vmatpush1.msra.mxu0 %v875
  %929 = vmatprep.subr.mxu0 0.0
  %930 = vmatpush1.msra.mxu0 %v876
  %931 = vmatprep.subr.mxu0 0.0
  %932 = vmatpush1.msra.mxu0 %v877
  %933 = vmatprep.subr.mxu0 0.0
  %934 = vmatpush1.msra.mxu0 %v878
  %935 = vmatprep.subr.mxu0 0.0
  %936 = vmatpush1.msra.mxu0 %v879
  %937 = vmatprep.subr.mxu0 0.0
  %938 = vmatpush1.msra.mxu0 %v880
  %939 = vmatprep.subr.mxu0 0.0
  %940 = vmatpush1.msra.mxu0 %v881
  %941 = vmatprep.subr.mxu0 0.0
  %942 = vmatpush1.msra.mxu0 %v882
  %943 = vmatprep.subr.mxu0 0.0
  %944 = vmatpush1.msra.mxu0 %v883
  %945 = vmatprep.subr.mxu0 0.0
  %946 = vmatpush1.msra.mxu0 %v884
  %947 = vmatprep.subr.mxu0 0.0
  %948 = vmatpush1.msra.mxu0 %v885
  %949 = vmatprep.subr.mxu0 0.0
  %950 = vmatpush1.msra.mxu0 %v886
  %951 = vmatprep.subr.mxu0 0.0
  %952 = vmatpush1.msra.mxu0 %v887
  %953 = vmatprep.subr.mxu0 0.0
  %954 = vmatpush1.msra.mxu0 %v888
  %955 = vmatprep.subr.mxu0 0.0
  %956 = vmatpush1.msra.mxu0 %v889
  %957 = vmatprep.subr.mxu0 0.0
  %958 = vmatpush1.msra.mxu0 %v890
  %959 = vmatprep.subr.mxu0 0.0
  %960 = vmatpush1.msra.mxu0 %v891
  %961 = vmatprep.subr.mxu0 0.0
  %962 = vmatpush1.msra.mxu0 %v892
  %963 = vmatprep.subr.mxu0 0.0
  %964 = vmatpush1.msra.mxu0 %v893
  %965 = vmatprep.subr.mxu0 0.0
  %966 = vmatpush1.msra.mxu0 %v894
  %967 = vmatprep.subr.mxu0 0.0
  %968 = vmatpush1.msra.mxu0 %v895
  %969 = vmatprep.subr.mxu0 0.0
  %970 = vmatpush1.msra.mxu0 %v896
  %971 = vmatprep.subr.mxu0 0.0
  %972 = vmatpush1.msra.mxu0 %v897
  %973 = vmatprep.subr.mxu0 0.0
  %974 = vmatpush1.msra.mxu0 %v898
  %975 = vmatprep.subr.mxu0 0.0
  %976 = vmatpush1.msra.mxu0 %v899
  %977 = vmatprep.subr.mxu0 0.0
  %978 = vmatpush1.msra.mxu0 %v900
  %979 = vmatprep.subr.mxu0 0.0
  %980 = vmatpush1.msra.mxu0 %v901
  %981 = vmatprep.subr.mxu0 0.0
  %982 = vmatpush1.msra.mxu0 %v902
  %983 = vmatprep.mubr.f32.mxu0 %v843
  %984 = vmatmul.mubr.f32.gmra.mrb[0].mxu0 %v855
  %v985 = vpop.f32.mrb[0].mxu0
  %v986 = vadd.f32 0.0, %v985
  %v987 = vpop.f32.mrb[0].mxu0
  %988 = vmatprep.mubr.f32.mxu0 %v844
  %989 = vmatmul.mubr.f32.gmra.mrb[0].mxu0 %v856
  %v990 = vpop.f32.mrb[0].mxu0
  %v991 = vadd.f32 0.0, %v990
  %v992 = vpop.f32.mrb[0].mxu0
  %993 = vmatprep.mubr.f32.mxu0 %v845
  %994 = vmatmul.mubr.f32.gmra.mrb[0].mxu0 %v857
  %v995 = vpop.f32.mrb[0].mxu0
  %v996 = vadd.f32 0.0, %v995
  %v997 = vpop.f32.mrb[0].mxu0
  %998 = vmatprep.mubr.f32.mxu0 %v846
  %999 = vmatmul.mubr.f32.gmra.mrb[0].mxu0 %v858
  %v1000 = vpop.f32.mrb[0].mxu0
  %v1001 = vadd.f32 0.0, %v1000
  %v1002 = vpop.f32.mrb[0].mxu0
  %1003 = vdwg.mxu0
  %1004 = vmatprep.subr.mxu0 0.0
  %1005 = vmatpush1.msra.mxu0 %v903
  %1006 = vmatprep.subr.mxu0 0.0
  %1007 = vmatpush1.msra.mxu0 %v904
  %1008 = vmatprep.subr.mxu0 0.0
  %1009 = vmatpush1.msra.mxu0 %v905
  %1010 = vmatprep.subr.mxu0 0.0
  %1011 = vmatpush1.msra.mxu0 %v906
  %1012 = vmatprep.subr.mxu0 0.0
  %1013 = vmatpush1.msra.mxu0 %v907
  %1014 = vmatprep.subr.mxu0 0.0
  %1015 = vmatpush1.msra.mxu0 %v908
  %1016 = vmatprep.subr.mxu0 0.0
  %1017 = vmatpush1.msra.mxu0 %v909
  %1018 = vmatprep.subr.mxu0 0.0
  %1019 = vmatpush1.msra.mxu0 %v910
  %1020 = vmatprep.subr.mxu0 0.0
  %1021 = vmatpush1.msra.mxu0 %v911
  %1022 = vmatprep.subr.mxu0 0.0
  %1023 = vmatpush1.msra.mxu0 %v912
  %1024 = vmatprep.subr.mxu0 0.0
  %1025 = vmatpush1.msra.mxu0 %v913
  %1026 = vmatprep.subr.mxu0 0.0
  %1027 = vmatpush1.msra.mxu0 %v914
  %1028 = vmatprep.subr.mxu0 0.0
  %1029 = vmatpush1.msra.mxu0 %v915
  %1030 = vmatprep.subr.mxu0 0.0
  %1031 = vmatpush1.msra.mxu0 %v916
  %1032 = vmatprep.subr.mxu0 0.0
  %1033 = vmatpush1.msra.mxu0 %v917
  %1034 = vmatprep.subr.mxu0 0.0
  %1035 = vmatpush1.msra.mxu0 %v918
  %1036 = vmatprep.subr.mxu0 0.0
  %1037 = vmatpush1.msra.mxu0 0.0
  %1038 = vmatprep.subr.mxu0 0.0
  %1039 = vmatpush1.msra.mxu0 0.0
  %1040 = vmatprep.subr.mxu0 0.0
  %1041 = vmatpush1.msra.mxu0 0.0
  %1042 = vmatprep.subr.mxu0 0.0
  %1043 = vmatpush1.msra.mxu0 0.0
  %1044 = vmatprep.subr.mxu0 0.0
  %1045 = vmatpush1.msra.mxu0 0.0
  %1046 = vmatprep.subr.mxu0 0.0
  %1047 = vmatpush1.msra.mxu0 0.0
  %1048 = vmatprep.subr.mxu0 0.0
  %1049 = vmatpush1.msra.mxu0 0.0
  %1050 = vmatprep.subr.mxu0 0.0
  %1051 = vmatpush1.msra.mxu0 0.0
  %1052 = vmatprep.subr.mxu0 0.0
  %1053 = vmatpush1.msra.mxu0 0.0
  %1054 = vmatprep.subr.mxu0 0.0
  %1055 = vmatpush1.msra.mxu0 0.0
  %1056 = vmatprep.subr.mxu0 0.0
  %1057 = vmatpush1.msra.mxu0 0.0
  %1058 = vmatprep.subr.mxu0 0.0
  %1059 = vmatpush1.msra.mxu0 0.0
  %1060 = vmatprep.subr.mxu0 0.0
  %1061 = vmatpush1.msra.mxu0 0.0
  %1062 = vmatprep.subr.mxu0 0.0
  %1063 = vmatpush1.msra.mxu0 0.0
  %1064 = vmatprep.subr.mxu0 0.0
  %1065 = vmatpush1.msra.mxu0 0.0
  %1066 = vmatprep.subr.mxu0 0.0
  %1067 = vmatpush1.msra.mxu0 0.0
  %1068 = vmatprep.mubr.f32.mxu0 0.0
  %1069 = vmatmul.mubr.f32.gmra.mrb[0].mxu0 %v867
  %v1070 = vpop.f32.mrb[0].mxu0
  %v1071 = vadd.f32 %v986, %v1070
  %v1072 = vpop.f32.mrb[0].mxu0
  %1073 = vmatprep.mubr.f32.mxu0 0.0
  %1074 = vmatmul.mubr.f32.gmra.mrb[0].mxu0 %v868
  %v1075 = vpop.f32.mrb[0].mxu0
  %v1076 = vadd.f32 %v991, %v1075
  %v1077 = vpop.f32.mrb[0].mxu0
  %1078 = vmatprep.mubr.f32.mxu0 0.0
  %1079 = vmatmul.mubr.f32.gmra.mrb[0].mxu0 %v869
  %v1080 = vpop.f32.mrb[0].mxu0
  %v1081 = vadd.f32 %v996, %v1080
  %v1082 = vpop.f32.mrb[0].mxu0
  %1083 = vmatprep.mubr.f32.mxu0 0.0
  %1084 = vmatmul.mubr.f32.gmra.mrb[0].mxu0 %v870
  %v1085 = vpop.f32.mrb[0].mxu0
  %v1086 = vadd.f32 %v1001, %v1085
  %v1087 = vpop.f32.mrb[0].mxu0
  %1088 = vdwg.mxu0
  %v1089 = vadd.f32 %v1071, %v1076
  %v1090 = vadd.f32 %v1089, %v1081
  %v1091 = vadd.f32 %v1090, %v1086
  %v1092 = vrot.slane %v1091, 4
  %v1093 = vadd.f32 %v1091, %v1092
  %v1094 = vrot.slane %v1093, 2
  %v1095 = vadd.f32 %v1093, %v1094
  %v1096 = vrot.slane %v1095, 1
  %v1097 = vadd.f32 %v1095, %v1096
  %v1098 = vmul.f32 %v1071, %v1071
  %v1099 = vmul.f32 %v1076, %v1076
  %v1100 = vmul.f32 %v1081, %v1081
  %v1101 = vmul.f32 %v1086, %v1086
  %v1102 = vadd.f32 %v1098, %v1099
  %v1103 = vadd.f32 %v1102, %v1100
  %v1104 = vadd.f32 %v1103, %v1101
  %v1105 = vrot.slane %v1104, 4
  %v1106 = vadd.f32 %v1104, %v1105
  %v1107 = vrot.slane %v1106, 2
  %v1108 = vadd.f32 %v1106, %v1107
  %v1109 = vrot.slane %v1108, 1
  %v1110 = vadd.f32 %v1108, %v1109
  %v1111 = vsel %vm354, %v1097, %v1110
  %1112 = vmatprep.subr.mxu0 0.0
  %1113 = vmatpush1.msra.mxu0 %v356
  %1114 = vmatprep.subr.mxu0 0.0
  %1115 = vmatpush1.msra.mxu0 %v357
  %1116 = vmatprep.subr.mxu0 0.0
  %1117 = vmatpush1.msra.mxu0 %v358
  %1118 = vmatprep.subr.mxu0 0.0
  %1119 = vmatpush1.msra.mxu0 %v359
  %1120 = vmatprep.subr.mxu0 0.0
  %1121 = vmatpush1.msra.mxu0 %v360
  %1122 = vmatprep.subr.mxu0 0.0
  %1123 = vmatpush1.msra.mxu0 %v361
  %1124 = vmatprep.subr.mxu0 0.0
  %1125 = vmatpush1.msra.mxu0 %v362
  %1126 = vmatprep.subr.mxu0 0.0
  %1127 = vmatpush1.msra.mxu0 %v363
  %1128 = vmatprep.subr.mxu0 0.0
  %1129 = vmatpush1.msra.mxu0 %v364
  %1130 = vmatprep.subr.mxu0 0.0
  %1131 = vmatpush1.msra.mxu0 %v365
  %1132 = vmatprep.subr.mxu0 0.0
  %1133 = vmatpush1.msra.mxu0 %v366
  %1134 = vmatprep.subr.mxu0 0.0
  %1135 = vmatpush1.msra.mxu0 %v367
  %1136 = vmatprep.subr.mxu0 0.0
  %1137 = vmatpush1.msra.mxu0 %v368
  %1138 = vmatprep.subr.mxu0 0.0
  %1139 = vmatpush1.msra.mxu0 %v369
  %1140 = vmatprep.subr.mxu0 0.0
  %1141 = vmatpush1.msra.mxu0 %v370
  %1142 = vmatprep.subr.mxu0 0.0
  %1143 = vmatpush1.msra.mxu0 %v371
  %1144 = vmatprep.subr.mxu0 0.0
  %1145 = vmatpush1.msra.mxu0 0.0
  %1146 = vmatprep.subr.mxu0 0.0
  %1147 = vmatpush1.msra.mxu0 0.0
  %1148 = vmatprep.subr.mxu0 0.0
  %1149 = vmatpush1.msra.mxu0 0.0
  %1150 = vmatprep.subr.mxu0 0.0
  %1151 = vmatpush1.msra.mxu0 0.0
  %1152 = vmatprep.subr.mxu0 0.0
  %1153 = vmatpush1.msra.mxu0 0.0
  %1154 = vmatprep.subr.mxu0 0.0
  %1155 = vmatpush1.msra.mxu0 0.0
  %1156 = vmatprep.subr.mxu0 0.0
  %1157 = vmatpush1.msra.mxu0 0.0
  %1158 = vmatprep.subr.mxu0 0.0
  %1159 = vmatpush1.msra.mxu0 0.0
  %1160 = vmatprep.subr.mxu0 0.0
  %1161 = vmatpush1.msra.mxu0 0.0
  %1162 = vmatprep.subr.mxu0 0.0
  %1163 = vmatpush1.msra.mxu0 0.0
  %1164 = vmatprep.subr.mxu0 0.0
  %1165 = vmatpush1.msra.mxu0 0.0
  %1166 = vmatprep.subr.mxu0 0.0
  %1167 = vmatpush1.msra.mxu0 0.0
  %1168 = vmatprep.subr.mxu0 0.0
  %1169 = vmatpush1.msra.mxu0 0.0
  %1170 = vmatprep.subr.mxu0 0.0
  %1171 = vmatpush1.msra.mxu0 0.0
  %1172 = vmatprep.subr.mxu0 0.0
  %1173 = vmatpush1.msra.mxu0 0.0
  %1174 = vmatprep.subr.mxu0 0.0
  %1175 = vmatpush1.msra.mxu0 0.0
  %1176 = vmatprep.mubr.f32.mxu0 0.0
  %1177 = vmatmul.mubr.f32.gmra.mrb[0].mxu0 %v1111
  %v1178 = vpop.f32.mrb[0].mxu0
  %v1179 = vadd.f32 0.0, %v1178
  %v1180 = vpop.f32.mrb[0].mxu0
  %1181 = vdwg.mxu0
  %v1182 = vmul.f32 %v1179, %v1179
  %v1184 = vrot.slane %v1182, 7
  %v1186 = vsub.f32 %v1179, %v1184
  %v1187 = vadd.f32 %v1186, 1e-05
  %v1188 = vrsqrt.pop %v1187
  %v1189 = vld [vmem:[%s4 + $0x4] sm:$0x1]
  %v1190 = vld [vmem:[%s4 + $0x5] sm:$0x1]
  %v1192 = vrot.slane %v1188, 1
  %v1194 = vmul.f32 %v1189, %v1192
  %v1195 = vmul.f32 %v1179, %v1194
  %v1196 = vsub.f32 %v1190, %v1195
  %v1197 = vlaneseq
  %v1198 = vshrl.u32 %v1197, 7
  %v1199 = vsub.s32 0, %v1198
  %v1200 = vrot.slane %v1194, %v1199
  %v1201 = vmul.f32 %v1071, %v1200
  %v1202 = vmul.f32 %v1076, %v1200
  %v1203 = vmul.f32 %v1081, %v1200
  %v1204 = vmul.f32 %v1086, %v1200
  %v1205 = vlaneseq
  %v1206 = vshrl.u32 %v1205, 7
  %v1207 = vsub.s32 0, %v1206
  %v1208 = vrot.slane %v1196, %v1207
  %v1209 = vadd.f32 %v1201, %v1208
  %v1210 = vadd.f32 %v1202, %v1208
  %v1211 = vadd.f32 %v1203, %v1208
  %v1212 = vadd.f32 %v1204, %v1208
  %v1213 = vmax.f32 %v1209, 0.0
  %v1214 = vmax.f32 %v1210, 0.0
  %v1215 = vmax.f32 %v1211, 0.0
  %v1216 = vmax.f32 %v1212, 0.0
  %1217 = vst [vmem:[%s6] sm:$0xff] %v1213
  %1218 = vst [vmem:[%s6 + $0x8] sm:$0xff] %v1214
  %1219 = vst [vmem:[%s6 + $0x10] sm:$0xff] %v1215
  %1220 = vst [vmem:[%s6 + $0x18] sm:$0xff] %v1216
  // Predicated region
  $region26: #{triple_block.1} parent=0 // pred_check
    _
  $region27: #{triple_block.1} parent=0 // pred_check_branch
    %1222 = sbr.rel (0) target = $region29
  $region28: #{triple_block.1} parent=0 // pred_region
    _
  $region29: #{triple_block.1} parent=0 // pred_fallthru
    _
  // Predicated region
  $region30: #{triple_block.1} parent=0 // pred_check
    _
  $region31: #{triple_block.1} parent=0 // pred_check_branch
    %1224 = sbr.rel (0) target = $region33
  $region32: #{triple_block.1} parent=0 // pred_region
    _
  $region33: #{triple_block.1} parent=0 // pred_fallthru
    _

</llo_original>
